<compile_context>
chip_gen: v7x
topology: tpu7x:2x2x1
jax: 0.10.0
libtpu: 0.0.40
codegen_flags: <defaults>
</compile_context>

<pallas_src>
import functools
import math

import jax
import jax.numpy as jnp
from jax.experimental import pallas as pl
from jax.experimental.pallas import tpu as pltpu


def _disentangled_kernel(x_ref, kT_ref, v_ref, wq_ref, bq_ref, wo_ref,
                         hmask_ref, grp_ref, att_out_ref, att_map_ref,
                         *, num_heads, eps):
    # ---- InstanceNorm2d: per-channel normalization over the spatial axis ----
    x = x_ref[0]                                           # (HW, C) f32
    mean = jnp.mean(x, axis=0, keepdims=True)              # (1, C)
    xc = x - mean
    var = jnp.mean(xc * xc, axis=0, keepdims=True)         # two-pass variance
    xn = xc * jax.lax.rsqrt(var + eps)

    # ---- Q projection (Embedder + 1/sqrt(d_h) folded; lane-padded to CP) ----
    q = jnp.dot(xn, wq_ref[...], preferred_element_type=jnp.float32)
    q = q + bq_ref[...]                                    # (HW, CP)

    # ---- all-head attention scores in one matmul (block-diagonal K^T) -------
    s = jnp.dot(q, kT_ref[0], preferred_element_type=jnp.float32)   # (HW, HL)

    # ---- per-head softmax ----------------------------------------------------
    # exact per-head max stabilizer: static num_heads loop of masked row-maxes
    hmask = hmask_ref[...]                                 # (num_heads, HL)
    neg = jnp.float32(-1e30)
    m = jnp.zeros_like(s)
    for h in range(num_heads):
        mask_h = hmask[h:h + 1, :]                         # (1, HL) static slice
        m_h = jnp.max(jnp.where(mask_h > 0, s, neg), axis=-1, keepdims=True)
        m = m + m_h * mask_h                               # broadcast into head's cols
    p = jnp.exp(s - m)

    # per-head denominators, summed & broadcast back in one MXU matmul against
    # the (grid-invariant, wrapper-precomputed) in-group indicator matrix
    denom = jnp.dot(p, grp_ref[...], preferred_element_type=jnp.float32)  # (HW, HL)
    r = pl.reciprocal(denom, approx=True)                  # EUP slot (co-issues)
    r = r * (2.0 - denom * r)                              # one Newton step: f32 parity
    attn = p * r
    att_map_ref[0] = attn                                  # single contiguous store

    # ---- context (block-diagonal V keeps heads separate) + output proj ------
    # lane-dense (HW, CP) result -> unmasked stores; padded cols are exact zeros
    ctx = jnp.dot(attn, v_ref[0], preferred_element_type=jnp.float32)    # (HW, CP)
    att_out_ref[0] = jnp.dot(ctx, wo_ref[...], preferred_element_type=jnp.float32)


def disentangled_transformer(x_nchw, bert, params, num_heads):
    B, C, H, W = x_nchw.shape
    L = bert.shape[1]
    T = bert.shape[2]
    HW = H * W
    dh = C // num_heads
    HL = num_heads * L
    CP = ((C + 127) // 128) * 128          # lane-dense padded channel width

    # ------------- wrapper-side precompute (cheap XLA layout plumbing) -------
    scale = 1.0 / math.sqrt(dh)
    wq_eff = (params["embed_w"] @ params["wq"]) * scale            # (C, C)
    bq_eff = (params["embed_b"] @ params["wq"]) * scale            # (1, C)
    wq_eff = jnp.pad(wq_eff, ((0, 0), (0, CP - C)))                # (C, CP)  pad cols = 0
    bq_eff = jnp.pad(bq_eff, ((0, 0), (0, CP - C)))                # (1, CP)
    wo_p = jnp.pad(params["wo"], ((0, CP - C), (0, CP - C)))       # (CP, CP)

    # K and V via one fused GEMM
    wkv = jnp.concatenate([params["wk"], params["wv"]], axis=1)    # (T, 2C)
    kv = (bert.reshape(B * L, T) @ wkv).reshape(B, L, 2 * C)
    k, v = kv[..., :C], kv[..., C:]                                # (B, L, C) each

    # block-diagonal head layout; K^T built directly in (C, HL) form
    head_of_col = jnp.arange(HL) // L                              # (HL,)
    head_of_ch = jnp.arange(C) // dh                               # (C,)
    mask_c_hl = (head_of_ch[:, None] == head_of_col[None, :]).astype(jnp.float32)
    kT_block = jnp.tile(jnp.swapaxes(k, 1, 2), (1, 1, num_heads)) * mask_c_hl[None]
    kT_block = jnp.pad(kT_block, ((0, 0), (0, CP - C), (0, 0)))    # (B, CP, HL)
    v_block = jnp.tile(v, (1, num_heads, 1)) * mask_c_hl.T[None]
    v_block = jnp.pad(v_block, ((0, 0), (0, 0), (0, CP - C)))      # (B, HL, CP)

    # grid-invariant softmax helpers, hoisted out of the kernel
    hmask = (jnp.arange(num_heads)[:, None] == head_of_col[None, :]).astype(jnp.float32)
    grp = (head_of_col[:, None] == head_of_col[None, :]).astype(jnp.float32)

    # NCHW -> (B, HW, C) tokens
    x_tok = jnp.transpose(x_nchw, (0, 2, 3, 1)).reshape(B, HW, C)

    kernel = functools.partial(_disentangled_kernel, num_heads=num_heads, eps=1e-5)
    att_out_p, att_map_flat = pl.pallas_call(
        kernel,
        out_shape=(
            jax.ShapeDtypeStruct((B, HW, CP), jnp.float32),
            jax.ShapeDtypeStruct((B, HW, HL), jnp.float32),
        ),
        grid=(B,),
        in_specs=[
            pl.BlockSpec((1, HW, C), lambda b: (b, 0, 0)),         # x tokens
            pl.BlockSpec((1, CP, HL), lambda b: (b, 0, 0)),        # K^T (block-diag, padded rows)
            pl.BlockSpec((1, HL, CP), lambda b: (b, 0, 0)),        # V   (block-diag, padded cols)
            pl.BlockSpec((C, CP), lambda b: (0, 0)),               # wq_eff (padded)
            pl.BlockSpec((1, CP), lambda b: (0, 0)),               # bq_eff (padded)
            pl.BlockSpec((CP, CP), lambda b: (0, 0)),              # wo (padded)
            pl.BlockSpec((num_heads, HL), lambda b: (0, 0)),       # per-head column mask
            pl.BlockSpec((HL, HL), lambda b: (0, 0)),              # in-group indicator
        ],
        out_specs=[
            pl.BlockSpec((1, HW, CP), lambda b: (b, 0, 0)),        # lane-dense att_out
            pl.BlockSpec((1, HW, HL), lambda b: (b, 0, 0)),        # att_map (true HL cols)
        ],
        compiler_params=pltpu.CompilerParams(dimension_semantics=("parallel",)),
    )(x_tok, kT_block, v_block, wq_eff, bq_eff, wo_p, hmask, grp)

    # glue: slice off channel padding, restore NCHW / (B, H, HW, L)
    att_out = jnp.transpose(att_out_p[..., :C].reshape(B, H, W, C), (0, 3, 1, 2))
    att_map = jnp.transpose(att_map_flat.reshape(B, HW, num_heads, L), (0, 2, 1, 3))
    return att_out, att_map


def _reference(x_nchw, bert, params, num_heads):
    """Pure-JAX reference used for a correctness check (unfolded math)."""
    B, C, H, W = x_nchw.shape
    mean = x_nchw.mean(axis=(2, 3), keepdims=True)
    var = ((x_nchw - mean) ** 2).mean(axis=(2, 3), keepdims=True)
    xn = (x_nchw - mean) / jnp.sqrt(var + 1e-5)
    tok = jnp.transpose(xn, (0, 2, 3, 1)).reshape(B, H * W, C)
    emb = tok @ params["embed_w"] + params["embed_b"]
    q = emb @ params["wq"]
    k = bert @ params["wk"]
    v = bert @ params["wv"]
    dh = C // num_heads
    qh = q.reshape(B, H * W, num_heads, dh).transpose(0, 2, 1, 3)
    kh = k.reshape(B, -1, num_heads, dh).transpose(0, 2, 1, 3)
    vh = v.reshape(B, -1, num_heads, dh).transpose(0, 2, 1, 3)
    s = jnp.einsum("bhqd,bhkd->bhqk", qh, kh) / jnp.sqrt(dh)
    attn = jax.nn.softmax(s, axis=-1)
    ctx = jnp.einsum("bhqk,bhkd->bhqd", attn, vh)
    ctx = ctx.transpose(0, 2, 1, 3).reshape(B, H * W, C)
    out = ctx @ params["wo"]
    out = jnp.transpose(out.reshape(B, H, W, C), (0, 3, 1, 2))
    return out, attn


if __name__ == "__main__":
    # small shapes consistent with the module
    B, C, H, W = 2, 32, 8, 8          # feature_size = 32 image feature map
    num_heads = 4                      # c_per_head = 8
    L, T = 8, 768                      # 8 BERT tokens, 768-dim (text_feature_size)

    key = jax.random.PRNGKey(0)
    k_x, k_b, k0, k1, k2, k3, k4, k5 = jax.random.split(key, 8)

    x = jax.random.normal(k_x, (B, C, H, W), jnp.float32)
    bert = jax.random.normal(k_b, (B, L, T), jnp.float32)

    params = {
        "embed_w": 0.02 * jax.random.normal(k0, (C, T), jnp.float32),
        "embed_b": 0.02 * jax.random.normal(k1, (1, T), jnp.float32),
        "wq":      0.02 * jax.random.normal(k2, (T, C), jnp.float32),
        "wk":      0.02 * jax.random.normal(k3, (T, C), jnp.float32),
        "wv":      0.02 * jax.random.normal(k4, (T, C), jnp.float32),
        "wo":      0.02 * jax.random.normal(k5, (C, C), jnp.float32),
    }

    att_out, att_map = jax.block_until_ready(
        disentangled_transformer(x, bert, params, num_heads))

    ref_out, ref_map = _reference(x, bert, params, num_heads)
    assert att_out.shape == (B, C, H, W)
    assert att_map.shape == (B, num_heads, H * W, L)
    assert jnp.allclose(att_out, ref_out, atol=2e-4, rtol=2e-4)
    assert jnp.allclose(att_map, ref_map, atol=2e-4, rtol=2e-4)

    print("KERNEL_OK")
</pallas_src>

<mosaic_0001>
module attributes {stable_mosaic.version = 11 : i64} {
  func.func @_disentangled_kernel(%arg0: i32, %arg1: memref<1x64x32xf32, #tpu.memory_space<vmem>>, %arg2: memref<1x128x32xf32, #tpu.memory_space<vmem>>, %arg3: memref<1x32x128xf32, #tpu.memory_space<vmem>>, %arg4: memref<32x128xf32, #tpu.memory_space<vmem>>, %arg5: memref<1x128xf32, #tpu.memory_space<vmem>>, %arg6: memref<128x128xf32, #tpu.memory_space<vmem>>, %arg7: memref<4x32xf32, #tpu.memory_space<vmem>>, %arg8: memref<32x32xf32, #tpu.memory_space<vmem>>, %arg9: memref<1x64x128xf32, #tpu.memory_space<vmem>>, %arg10: memref<1x64x32xf32, #tpu.memory_space<vmem>>) attributes {dimension_semantics = [#tpu.dimension_semantics<parallel>], iteration_bounds = array<i64: 2>, scalar_prefetch = 0 : i64, scratch_operands = 0 : i64, tpu.core_type = #tpu.core_type<tc>, window_params = [{transform_indices = @transform_0, window_bounds = array<i64: 1, 64, 32>}, {transform_indices = @transform_1, window_bounds = array<i64: 1, 128, 32>}, {transform_indices = @transform_2, window_bounds = array<i64: 1, 32, 128>}, {pipeline_mode = #tpu.pipeline_mode<synchronous>, transform_indices = @transform_3, window_bounds = array<i64: 32, 128>}, {pipeline_mode = #tpu.pipeline_mode<synchronous>, transform_indices = @transform_4, window_bounds = array<i64: 1, 128>}, {pipeline_mode = #tpu.pipeline_mode<synchronous>, transform_indices = @transform_5, window_bounds = array<i64: 128, 128>}, {pipeline_mode = #tpu.pipeline_mode<synchronous>, transform_indices = @transform_6, window_bounds = array<i64: 4, 32>}, {pipeline_mode = #tpu.pipeline_mode<synchronous>, transform_indices = @transform_7, window_bounds = array<i64: 32, 32>}, {transform_indices = @transform_8, window_bounds = array<i64: 1, 64, 128>}, {transform_indices = @transform_9, window_bounds = array<i64: 1, 64, 32>}]} {
    %c0 = arith.constant 0 : index
    %c0_0 = arith.constant 0 : index
    %c0_1 = arith.constant 0 : index
    %0 = vector.load %arg1[%c0, %c0_0, %c0_1] : memref<1x64x32xf32, #tpu.memory_space<vmem>>, vector<1x64x32xf32>
    %1 = vector.shape_cast %0 : vector<1x64x32xf32> to vector<64x32xf32>
    %cst = arith.constant dense<0.000000e+00> : vector<32xf32>
    %2 = vector.multi_reduction <add>, %1, %cst [0] : vector<64x32xf32> to vector<32xf32>
    %3 = vector.shape_cast %2 : vector<32xf32> to vector<1x32xf32>
    %cst_2 = arith.constant 6.400000e+01 : f32
    %4 = vector.broadcast %cst_2 : f32 to vector<1x32xf32>
    %5 = arith.divf %3, %4 : vector<1x32xf32>
    %6 = vector.broadcast %5 : vector<1x32xf32> to vector<64x32xf32>
    %7 = arith.subf %1, %6 : vector<64x32xf32>
    %8 = arith.mulf %7, %7 : vector<64x32xf32>
    %cst_3 = arith.constant dense<0.000000e+00> : vector<32xf32>
    %9 = vector.multi_reduction <add>, %8, %cst_3 [0] : vector<64x32xf32> to vector<32xf32>
    %10 = vector.shape_cast %9 : vector<32xf32> to vector<1x32xf32>
    %cst_4 = arith.constant 6.400000e+01 : f32
    %11 = vector.broadcast %cst_4 : f32 to vector<1x32xf32>
    %12 = arith.divf %10, %11 : vector<1x32xf32>
    %cst_5 = arith.constant 9.99999974E-6 : f32
    %13 = vector.broadcast %cst_5 : f32 to vector<1x32xf32>
    %14 = arith.addf %12, %13 : vector<1x32xf32>
    %15 = math.rsqrt %14 : vector<1x32xf32>
    %16 = vector.broadcast %15 : vector<1x32xf32> to vector<64x32xf32>
    %17 = arith.mulf %7, %16 : vector<64x32xf32>
    %c0_6 = arith.constant 0 : index
    %c0_7 = arith.constant 0 : index
    %18 = vector.load %arg4[%c0_6, %c0_7] : memref<32x128xf32, #tpu.memory_space<vmem>>, vector<32x128xf32>
    %cst_8 = arith.constant dense<0.000000e+00> : vector<64x128xf32>
    %19 = tpu.matmul %17, %18, %cst_8 {dimension_numbers = #tpu.dot_dimension_numbers<[1], [0], [0], [1], [0, 0, 1, 1], [], []>} : vector<64x32xf32>, vector<32x128xf32>, vector<64x128xf32> -> vector<64x128xf32>
    %c0_9 = arith.constant 0 : index
    %c0_10 = arith.constant 0 : index
    %20 = vector.load %arg5[%c0_9, %c0_10] : memref<1x128xf32, #tpu.memory_space<vmem>>, vector<1x128xf32>
    %21 = vector.broadcast %20 : vector<1x128xf32> to vector<64x128xf32>
    %22 = arith.addf %19, %21 : vector<64x128xf32>
    %c0_11 = arith.constant 0 : index
    %c0_12 = arith.constant 0 : index
    %c0_13 = arith.constant 0 : index
    %23 = vector.load %arg2[%c0_11, %c0_12, %c0_13] : memref<1x128x32xf32, #tpu.memory_space<vmem>>, vector<1x128x32xf32>
    %24 = vector.shape_cast %23 : vector<1x128x32xf32> to vector<128x32xf32>
    %cst_14 = arith.constant dense<0.000000e+00> : vector<64x32xf32>
    %25 = tpu.matmul %22, %24, %cst_14 {dimension_numbers = #tpu.dot_dimension_numbers<[1], [0], [0], [1], [0, 0, 1, 1], [], []>} : vector<64x128xf32>, vector<128x32xf32>, vector<64x32xf32> -> vector<64x32xf32>
    %c0_15 = arith.constant 0 : index
    %c0_16 = arith.constant 0 : index
    %26 = vector.load %arg7[%c0_15, %c0_16] : memref<4x32xf32, #tpu.memory_space<vmem>>, vector<4x32xf32>
    %cst_17 = arith.constant 0.000000e+00 : f32
    %27 = vector.broadcast %cst_17 : f32 to vector<64x32xf32>
    %28 = vector.extract_strided_slice %26 {offsets = [0, 0], sizes = [1, 32], strides = [1, 1]} : vector<4x32xf32> to vector<1x32xf32>
    %cst_18 = arith.constant 0.000000e+00 : f32
    %29 = vector.broadcast %cst_18 : f32 to vector<1x32xf32>
    %30 = arith.cmpf ogt, %28, %29 : vector<1x32xf32>
    %cst_19 = arith.constant -1.000000e+30 : f32
    %31 = vector.shape_cast %30 : vector<1x32xi1> to vector<1x32xi1>
    %32 = vector.broadcast %31 : vector<1x32xi1> to vector<64x32xi1>
    %33 = vector.broadcast %cst_19 : f32 to vector<64x32xf32>
    %34 = arith.select %32, %25, %33 : vector<64x32xi1>, vector<64x32xf32>
    %cst_20 = arith.constant dense<0xFF800000> : vector<64xf32>
    %35 = vector.multi_reduction <maximumf>, %34, %cst_20 [1] : vector<64x32xf32> to vector<64xf32>
    %36 = vector.shape_cast %35 : vector<64xf32> to vector<64x1xf32>
    %37 = vector.broadcast %36 : vector<64x1xf32> to vector<64x32xf32>
    %38 = vector.broadcast %28 : vector<1x32xf32> to vector<64x32xf32>
    %39 = arith.mulf %37, %38 : vector<64x32xf32>
    %40 = arith.addf %27, %39 : vector<64x32xf32>
    %41 = vector.extract_strided_slice %26 {offsets = [1, 0], sizes = [1, 32], strides = [1, 1]} : vector<4x32xf32> to vector<1x32xf32>
    %cst_21 = arith.constant 0.000000e+00 : f32
    %42 = vector.broadcast %cst_21 : f32 to vector<1x32xf32>
    %43 = arith.cmpf ogt, %41, %42 : vector<1x32xf32>
    %cst_22 = arith.constant -1.000000e+30 : f32
    %44 = vector.shape_cast %43 : vector<1x32xi1> to vector<1x32xi1>
    %45 = vector.broadcast %44 : vector<1x32xi1> to vector<64x32xi1>
    %46 = vector.broadcast %cst_22 : f32 to vector<64x32xf32>
    %47 = arith.select %45, %25, %46 : vector<64x32xi1>, vector<64x32xf32>
    %cst_23 = arith.constant dense<0xFF800000> : vector<64xf32>
    %48 = vector.multi_reduction <maximumf>, %47, %cst_23 [1] : vector<64x32xf32> to vector<64xf32>
    %49 = vector.shape_cast %48 : vector<64xf32> to vector<64x1xf32>
    %50 = vector.broadcast %49 : vector<64x1xf32> to vector<64x32xf32>
    %51 = vector.broadcast %41 : vector<1x32xf32> to vector<64x32xf32>
    %52 = arith.mulf %50, %51 : vector<64x32xf32>
    %53 = arith.addf %40, %52 : vector<64x32xf32>
    %54 = vector.extract_strided_slice %26 {offsets = [2, 0], sizes = [1, 32], strides = [1, 1]} : vector<4x32xf32> to vector<1x32xf32>
    %cst_24 = arith.constant 0.000000e+00 : f32
    %55 = vector.broadcast %cst_24 : f32 to vector<1x32xf32>
    %56 = arith.cmpf ogt, %54, %55 : vector<1x32xf32>
    %cst_25 = arith.constant -1.000000e+30 : f32
    %57 = vector.shape_cast %56 : vector<1x32xi1> to vector<1x32xi1>
    %58 = vector.broadcast %57 : vector<1x32xi1> to vector<64x32xi1>
    %59 = vector.broadcast %cst_25 : f32 to vector<64x32xf32>
    %60 = arith.select %58, %25, %59 : vector<64x32xi1>, vector<64x32xf32>
    %cst_26 = arith.constant dense<0xFF800000> : vector<64xf32>
    %61 = vector.multi_reduction <maximumf>, %60, %cst_26 [1] : vector<64x32xf32> to vector<64xf32>
    %62 = vector.shape_cast %61 : vector<64xf32> to vector<64x1xf32>
    %63 = vector.broadcast %62 : vector<64x1xf32> to vector<64x32xf32>
    %64 = vector.broadcast %54 : vector<1x32xf32> to vector<64x32xf32>
    %65 = arith.mulf %63, %64 : vector<64x32xf32>
    %66 = arith.addf %53, %65 : vector<64x32xf32>
    %67 = vector.extract_strided_slice %26 {offsets = [3, 0], sizes = [1, 32], strides = [1, 1]} : vector<4x32xf32> to vector<1x32xf32>
    %cst_27 = arith.constant 0.000000e+00 : f32
    %68 = vector.broadcast %cst_27 : f32 to vector<1x32xf32>
    %69 = arith.cmpf ogt, %67, %68 : vector<1x32xf32>
    %cst_28 = arith.constant -1.000000e+30 : f32
    %70 = vector.shape_cast %69 : vector<1x32xi1> to vector<1x32xi1>
    %71 = vector.broadcast %70 : vector<1x32xi1> to vector<64x32xi1>
    %72 = vector.broadcast %cst_28 : f32 to vector<64x32xf32>
    %73 = arith.select %71, %25, %72 : vector<64x32xi1>, vector<64x32xf32>
    %cst_29 = arith.constant dense<0xFF800000> : vector<64xf32>
    %74 = vector.multi_reduction <maximumf>, %73, %cst_29 [1] : vector<64x32xf32> to vector<64xf32>
    %75 = vector.shape_cast %74 : vector<64xf32> to vector<64x1xf32>
    %76 = vector.broadcast %75 : vector<64x1xf32> to vector<64x32xf32>
    %77 = vector.broadcast %67 : vector<1x32xf32> to vector<64x32xf32>
    %78 = arith.mulf %76, %77 : vector<64x32xf32>
    %79 = arith.addf %66, %78 : vector<64x32xf32>
    %80 = arith.subf %25, %79 : vector<64x32xf32>
    %81 = math.exp %80 : vector<64x32xf32>
    %c0_30 = arith.constant 0 : index
    %c0_31 = arith.constant 0 : index
    %82 = vector.load %arg8[%c0_30, %c0_31] : memref<32x32xf32, #tpu.memory_space<vmem>>, vector<32x32xf32>
    %cst_32 = arith.constant dense<0.000000e+00> : vector<64x32xf32>
    %83 = tpu.matmul %81, %82, %cst_32 {dimension_numbers = #tpu.dot_dimension_numbers<[1], [0], [0], [1], [0, 0, 1, 1], [], []>} : vector<64x32xf32>, vector<32x32xf32>, vector<64x32xf32> -> vector<64x32xf32>
    %84 = tpu.reciprocal %83 {approx = true} : vector<64x32xf32> -> vector<64x32xf32>
    %85 = arith.mulf %83, %84 : vector<64x32xf32>
    %cst_33 = arith.constant 2.000000e+00 : f32
    %86 = vector.broadcast %cst_33 : f32 to vector<64x32xf32>
    %87 = arith.subf %86, %85 : vector<64x32xf32>
    %88 = arith.mulf %84, %87 : vector<64x32xf32>
    %89 = arith.mulf %81, %88 : vector<64x32xf32>
    %c0_34 = arith.constant 0 : index
    %c0_35 = arith.constant 0 : index
    %c0_36 = arith.constant 0 : index
    %90 = vector.load %arg10[%c0_34, %c0_35, %c0_36] : memref<1x64x32xf32, #tpu.memory_space<vmem>>, vector<1x64x32xf32>
    %91 = vector.shape_cast %90 : vector<1x64x32xf32> to vector<64x32xf32>
    %92 = vector.shape_cast %89 : vector<64x32xf32> to vector<1x64x32xf32>
    tpu.vector_store %arg10[%c0_34, %c0_35, %c0_36], %92 {strides = array<i32>} : memref<1x64x32xf32, #tpu.memory_space<vmem>>, vector<1x64x32xf32>,
    %c0_37 = arith.constant 0 : index
    %c0_38 = arith.constant 0 : index
    %c0_39 = arith.constant 0 : index
    %93 = vector.load %arg3[%c0_37, %c0_38, %c0_39] : memref<1x32x128xf32, #tpu.memory_space<vmem>>, vector<1x32x128xf32>
    %94 = vector.shape_cast %93 : vector<1x32x128xf32> to vector<32x128xf32>
    %cst_40 = arith.constant dense<0.000000e+00> : vector<64x128xf32>
    %95 = tpu.matmul %89, %94, %cst_40 {dimension_numbers = #tpu.dot_dimension_numbers<[1], [0], [0], [1], [0, 0, 1, 1], [], []>} : vector<64x32xf32>, vector<32x128xf32>, vector<64x128xf32> -> vector<64x128xf32>
    %c0_41 = arith.constant 0 : index
    %c0_42 = arith.constant 0 : index
    %96 = vector.load %arg6[%c0_41, %c0_42] : memref<128x128xf32, #tpu.memory_space<vmem>>, vector<128x128xf32>
    %cst_43 = arith.constant dense<0.000000e+00> : vector<64x128xf32>
    %97 = tpu.matmul %95, %96, %cst_43 {dimension_numbers = #tpu.dot_dimension_numbers<[1], [0], [0], [1], [0, 0, 1, 1], [], []>} : vector<64x128xf32>, vector<128x128xf32>, vector<64x128xf32> -> vector<64x128xf32>
    %c0_44 = arith.constant 0 : index
    %c0_45 = arith.constant 0 : index
    %c0_46 = arith.constant 0 : index
    %98 = vector.load %arg9[%c0_44, %c0_45, %c0_46] : memref<1x64x128xf32, #tpu.memory_space<vmem>>, vector<1x64x128xf32>
    %99 = vector.shape_cast %98 : vector<1x64x128xf32> to vector<64x128xf32>
    %100 = vector.shape_cast %97 : vector<64x128xf32> to vector<1x64x128xf32>
    tpu.vector_store %arg9[%c0_44, %c0_45, %c0_46], %100 {strides = array<i32>} : memref<1x64x128xf32, #tpu.memory_space<vmem>>, vector<1x64x128xf32>,
    return
  }
  func.func @transform_0(%arg0: i32) -> (i32, i32, i32) {
    %c0_i32 = arith.constant 0 : i32
    %c0_i32_0 = arith.constant 0 : i32
    %c0_i32_1 = arith.constant 0 : i32
    return %arg0, %c0_i32, %c0_i32_0 : i32, i32, i32
  }
  func.func @transform_1(%arg0: i32) -> (i32, i32, i32) {
    %c0_i32 = arith.constant 0 : i32
    %c0_i32_0 = arith.constant 0 : i32
    %c0_i32_1 = arith.constant 0 : i32
    return %arg0, %c0_i32, %c0_i32_0 : i32, i32, i32
  }
  func.func @transform_2(%arg0: i32) -> (i32, i32, i32) {
    %c0_i32 = arith.constant 0 : i32
    %c0_i32_0 = arith.constant 0 : i32
    %c0_i32_1 = arith.constant 0 : i32
    return %arg0, %c0_i32, %c0_i32_0 : i32, i32, i32
  }
  func.func @transform_3(%arg0: i32) -> (i32, i32) {
    %c0_i32 = arith.constant 0 : i32
    %c0_i32_0 = arith.constant 0 : i32
    %c0_i32_1 = arith.constant 0 : i32
    return %c0_i32, %c0_i32_0 : i32, i32
  }
  func.func @transform_4(%arg0: i32) -> (i32, i32) {
    %c0_i32 = arith.constant 0 : i32
    %c0_i32_0 = arith.constant 0 : i32
    %c0_i32_1 = arith.constant 0 : i32
    return %c0_i32, %c0_i32_0 : i32, i32
  }
  func.func @transform_5(%arg0: i32) -> (i32, i32) {
    %c0_i32 = arith.constant 0 : i32
    %c0_i32_0 = arith.constant 0 : i32
    %c0_i32_1 = arith.constant 0 : i32
    return %c0_i32, %c0_i32_0 : i32, i32
  }
  func.func @transform_6(%arg0: i32) -> (i32, i32) {
    %c0_i32 = arith.constant 0 : i32
    %c0_i32_0 = arith.constant 0 : i32
    %c0_i32_1 = arith.constant 0 : i32
    return %c0_i32, %c0_i32_0 : i32, i32
  }
  func.func @transform_7(%arg0: i32) -> (i32, i32) {
    %c0_i32 = arith.constant 0 : i32
    %c0_i32_0 = arith.constant 0 : i32
    %c0_i32_1 = arith.constant 0 : i32
    return %c0_i32, %c0_i32_0 : i32, i32
  }
  func.func @transform_8(%arg0: i32) -> (i32, i32, i32) {
    %c0_i32 = arith.constant 0 : i32
    %c0_i32_0 = arith.constant 0 : i32
    %c0_i32_1 = arith.constant 0 : i32
    return %arg0, %c0_i32, %c0_i32_0 : i32, i32, i32
  }
  func.func @transform_9(%arg0: i32) -> (i32, i32, i32) {
    %c0_i32 = arith.constant 0 : i32
    %c0_i32_0 = arith.constant 0 : i32
    %c0_i32_1 = arith.constant 0 : i32
    return %arg0, %c0_i32, %c0_i32_0 : i32, i32, i32
  }
}

</mosaic_0001>

<llo_original>
// kernel: tpu_custom_call.1
$region0: #{tpu_custom_call.1}
  #allocation0 [shape = 'u32[]', space=smem, size = 0x4, offset = 0x4, fixed_abs, tag = 'smem constant byte address 0x4 - core index']
  #allocation1 [shape = 'u32[144,128]{1,0:T(1,128)}', space=vmem, size = 0x12000, scoped, tag = 'internal scratch']
  %s0 = inlined_call_operand.vmem [shape: f32[2,64,32], index: 0, kind: input, shape index: {}]
  %s1 = inlined_call_operand.vmem [shape: f32[2,128,32], index: 1, kind: input, shape index: {}]
  %s2 = inlined_call_operand.vmem [shape: f32[2,32,128], index: 2, kind: input, shape index: {}]
  %s3 = inlined_call_operand.vmem [shape: f32[32,128], index: 3, kind: input, shape index: {}]
  %s4 = inlined_call_operand.vmem [shape: f32[1,128], index: 4, kind: input, shape index: {}]
  %s5 = inlined_call_operand.vmem [shape: f32[128,128], index: 5, kind: input, shape index: {}]
  %s6 = inlined_call_operand.vmem [shape: f32[4,32], index: 6, kind: input, shape index: {}]
  %s7 = inlined_call_operand.vmem [shape: f32[32,32], index: 7, kind: input, shape index: {}]
  %s8 = inlined_call_operand.hbm [shape: f32[2,64,128], index: 8, kind: output, shape index: {0}]
  %s9 = inlined_call_operand.vmem [shape: f32[2,64,32], index: 9, kind: output, shape index: {1}]
  %10 = xla_tuple %s8, %s9
  %s11 = sld [smem:[#allocation0]]
  $region73: #{tpu_custom_call.1} parent=0
    _
  %s13 = ssub.s32 1, %s11
  %s14 = scalar_select 0, %s13, %s11
  $region1: #{tpu_custom_call.1} parent=0
    #allocation2 [shape = 'u8[65536]{0}', space=vmem, size = 0x10000, scoped, tag = 'output window, operand 0']
    #allocation3 [shape = 's32[2]{0}', space=sflag, size = 0x8, scoped, tag = 'scoped memory for tpu_custom_call.1']
    %15 = vsyncpa [#allocation3], 0
    %s16 = scalar_lea.sflag [#allocation3], 1
    %17 = vsyncpa %s16, 0
    loop: start=0, step=1, limit=4
    $region2: #{tpu_custom_call.1} parent=1 // loop_pre_header
      _
    $region3: #{tpu_custom_call.1} parent=1 // loop_header
      %s19 = sphi 0, %s23
      %p20 = scmp.ge.s32.totalorder %s19, 4
      %s29 = sphi 0, %s31
      %s32 = sphi 0, %s29
      %s33 = sphi 0, %s32
      %s49 = sphi 0, %s33
      %s55 = sphi 0, %s57
      %s58 = sphi 0, %s55
      %s59 = sphi 0, %s58
      %s75 = sphi 0, %s59
      %s81 = sphi 0, %s83
      %s84 = sphi 0, %s81
      %s85 = sphi 0, %s84
      %s101 = sphi 0, %s85
      %s105 = sphi 0, %s105
      %s107 = sphi 0, %s105
      %s108 = sphi 0, %s107
      %s122 = sphi 0, %s108
      %s126 = sphi 0, %s126
      %s128 = sphi 0, %s126
      %s129 = sphi 0, %s128
      %s143 = sphi 0, %s129
      %s147 = sphi 0, %s147
      %s149 = sphi 0, %s147
      %s150 = sphi 0, %s149
      %s164 = sphi 0, %s150
      %s168 = sphi 0, %s168
      %s170 = sphi 0, %s168
      %s171 = sphi 0, %s170
      %s185 = sphi 0, %s171
      %s189 = sphi 0, %s189
      %s191 = sphi 0, %s189
      %s192 = sphi 0, %s191
      %s206 = sphi 0, %s192
      %s212 = sphi 0, %s214
      %s215 = sphi 0, %s212
      %s216 = sphi 0, %s215
      %s232 = sphi 0, %s216
      %s238 = sphi 0, %s240
      %s241 = sphi 0, %s238
      %s242 = sphi 0, %s241
      %s258 = sphi 0, %s242
    $region4: #{tpu_custom_call.1} parent=1 // loop_header_branch
      %22 = sbr.rel (%p20) target = $region8
    $region5: #{tpu_custom_call.1} parent=1 // loop_body
      %s24 = ssub.s32 %s19, 1
      %s25 = ssub.s32 %s19, 2
      %s26 = sadd.s32 %s19, 1
      %s27 = ssub.s32 %s19, %s26
      %p28 = scmp.eq.s32.totalorder %s27, 0
      %s30 = sadd.s32 %s29, 1
      %s31 = scalar_select %p28, %s29, %s30
      %p34 = pneg %p28
      %p35 = scmp.eq.s32.totalorder %s19, 1
      %p36 = por %p34, %p35
      %p37 = scmp.ne.s32.totalorder %s29, %s32
      %p38 = scmp.eq.s32.totalorder %s19, 0
      %p39 = por %p37, %p38
      %p40 = scmp.ne.s32.totalorder %s29, %s32
      %p41 = scmp.eq.s32.totalorder %s24, 1
      %p42 = por %p40, %p41
      %p43 = scmp.ne.s32.totalorder %s32, %s33
      %p44 = scmp.eq.s32.totalorder %s24, 0
      %p45 = por %p43, %p44
      %p46 = scmp.ne.s32.totalorder %s32, %s33
      %p47 = scmp.eq.s32.totalorder %s25, 1
      %p48 = por %p46, %p47
      %p50 = scmp.ne.s32.totalorder %s33, %s49
      %p51 = scmp.eq.s32.totalorder %s25, 0
      %p52 = por %p50, %p51
      %s53 = ssub.s32 %s19, %s26
      %p54 = scmp.eq.s32.totalorder %s53, 0
      %s56 = sadd.s32 %s55, 1
      %s57 = scalar_select %p54, %s55, %s56
      %p60 = pneg %p54
      %p61 = scmp.eq.s32.totalorder %s19, 1
      %p62 = por %p60, %p61
      %p63 = scmp.ne.s32.totalorder %s55, %s58
      %p64 = scmp.eq.s32.totalorder %s19, 0
      %p65 = por %p63, %p64
      %p66 = scmp.ne.s32.totalorder %s55, %s58
      %p67 = scmp.eq.s32.totalorder %s24, 1
      %p68 = por %p66, %p67
      %p69 = scmp.ne.s32.totalorder %s58, %s59
      %p70 = scmp.eq.s32.totalorder %s24, 0
      %p71 = por %p69, %p70
      %p72 = scmp.ne.s32.totalorder %s58, %s59
      %p73 = scmp.eq.s32.totalorder %s25, 1
      %p74 = por %p72, %p73
      %p76 = scmp.ne.s32.totalorder %s59, %s75
      %p77 = scmp.eq.s32.totalorder %s25, 0
      %p78 = por %p76, %p77
      %s79 = ssub.s32 %s19, %s26
      %p80 = scmp.eq.s32.totalorder %s79, 0
      %s82 = sadd.s32 %s81, 1
      %s83 = scalar_select %p80, %s81, %s82
      %p86 = pneg %p80
      %p87 = scmp.eq.s32.totalorder %s19, 1
      %p88 = por %p86, %p87
      %p89 = scmp.ne.s32.totalorder %s81, %s84
      %p90 = scmp.eq.s32.totalorder %s19, 0
      %p91 = por %p89, %p90
      %p92 = scmp.ne.s32.totalorder %s81, %s84
      %p93 = scmp.eq.s32.totalorder %s24, 1
      %p94 = por %p92, %p93
      %p95 = scmp.ne.s32.totalorder %s84, %s85
      %p96 = scmp.eq.s32.totalorder %s24, 0
      %p97 = por %p95, %p96
      %p98 = scmp.ne.s32.totalorder %s84, %s85
      %p99 = scmp.eq.s32.totalorder %s25, 1
      %p100 = por %p98, %p99
      %p102 = scmp.ne.s32.totalorder %s85, %s101
      %p103 = scmp.eq.s32.totalorder %s25, 0
      %p104 = por %p102, %p103
      %s106 = sadd.s32 %s105, 1
      %p109 = scmp.eq.s32.totalorder %s19, 1
      %p110 = scmp.ne.s32.totalorder %s105, %s107
      %p111 = scmp.eq.s32.totalorder %s19, 0
      %p112 = por %p110, %p111
      %p113 = scmp.ne.s32.totalorder %s105, %s107
      %p114 = scmp.eq.s32.totalorder %s24, 1
      %p115 = por %p113, %p114
      %p116 = scmp.ne.s32.totalorder %s107, %s108
      %p117 = scmp.eq.s32.totalorder %s24, 0
      %p118 = por %p116, %p117
      %p119 = scmp.ne.s32.totalorder %s107, %s108
      %p120 = scmp.eq.s32.totalorder %s25, 1
      %p121 = por %p119, %p120
      %p123 = scmp.ne.s32.totalorder %s108, %s122
      %p124 = scmp.eq.s32.totalorder %s25, 0
      %p125 = por %p123, %p124
      %s127 = sadd.s32 %s126, 1
      %p130 = scmp.eq.s32.totalorder %s19, 1
      %p131 = scmp.ne.s32.totalorder %s126, %s128
      %p132 = scmp.eq.s32.totalorder %s19, 0
      %p133 = por %p131, %p132
      %p134 = scmp.ne.s32.totalorder %s126, %s128
      %p135 = scmp.eq.s32.totalorder %s24, 1
      %p136 = por %p134, %p135
      %p137 = scmp.ne.s32.totalorder %s128, %s129
      %p138 = scmp.eq.s32.totalorder %s24, 0
      %p139 = por %p137, %p138
      %p140 = scmp.ne.s32.totalorder %s128, %s129
      %p141 = scmp.eq.s32.totalorder %s25, 1
      %p142 = por %p140, %p141
      %p144 = scmp.ne.s32.totalorder %s129, %s143
      %p145 = scmp.eq.s32.totalorder %s25, 0
      %p146 = por %p144, %p145
      %s148 = sadd.s32 %s147, 1
      %p151 = scmp.eq.s32.totalorder %s19, 1
      %p152 = scmp.ne.s32.totalorder %s147, %s149
      %p153 = scmp.eq.s32.totalorder %s19, 0
      %p154 = por %p152, %p153
      %p155 = scmp.ne.s32.totalorder %s147, %s149
      %p156 = scmp.eq.s32.totalorder %s24, 1
      %p157 = por %p155, %p156
      %p158 = scmp.ne.s32.totalorder %s149, %s150
      %p159 = scmp.eq.s32.totalorder %s24, 0
      %p160 = por %p158, %p159
      %p161 = scmp.ne.s32.totalorder %s149, %s150
      %p162 = scmp.eq.s32.totalorder %s25, 1
      %p163 = por %p161, %p162
      %p165 = scmp.ne.s32.totalorder %s150, %s164
      %p166 = scmp.eq.s32.totalorder %s25, 0
      %p167 = por %p165, %p166
      %s169 = sadd.s32 %s168, 1
      %p172 = scmp.eq.s32.totalorder %s19, 1
      %p173 = scmp.ne.s32.totalorder %s168, %s170
      %p174 = scmp.eq.s32.totalorder %s19, 0
      %p175 = por %p173, %p174
      %p176 = scmp.ne.s32.totalorder %s168, %s170
      %p177 = scmp.eq.s32.totalorder %s24, 1
      %p178 = por %p176, %p177
      %p179 = scmp.ne.s32.totalorder %s170, %s171
      %p180 = scmp.eq.s32.totalorder %s24, 0
      %p181 = por %p179, %p180
      %p182 = scmp.ne.s32.totalorder %s170, %s171
      %p183 = scmp.eq.s32.totalorder %s25, 1
      %p184 = por %p182, %p183
      %p186 = scmp.ne.s32.totalorder %s171, %s185
      %p187 = scmp.eq.s32.totalorder %s25, 0
      %p188 = por %p186, %p187
      %s190 = sadd.s32 %s189, 1
      %p193 = scmp.eq.s32.totalorder %s19, 1
      %p194 = scmp.ne.s32.totalorder %s189, %s191
      %p195 = scmp.eq.s32.totalorder %s19, 0
      %p196 = por %p194, %p195
      %p197 = scmp.ne.s32.totalorder %s189, %s191
      %p198 = scmp.eq.s32.totalorder %s24, 1
      %p199 = por %p197, %p198
      %p200 = scmp.ne.s32.totalorder %s191, %s192
      %p201 = scmp.eq.s32.totalorder %s24, 0
      %p202 = por %p200, %p201
      %p203 = scmp.ne.s32.totalorder %s191, %s192
      %p204 = scmp.eq.s32.totalorder %s25, 1
      %p205 = por %p203, %p204
      %p207 = scmp.ne.s32.totalorder %s192, %s206
      %p208 = scmp.eq.s32.totalorder %s25, 0
      %p209 = por %p207, %p208
      %s210 = ssub.s32 %s19, %s26
      %p211 = scmp.eq.s32.totalorder %s210, 0
      %s213 = sadd.s32 %s212, 1
      %s214 = scalar_select %p211, %s212, %s213
      %p217 = pneg %p211
      %p218 = scmp.eq.s32.totalorder %s19, 1
      %p219 = por %p217, %p218
      %p220 = scmp.ne.s32.totalorder %s212, %s215
      %p221 = scmp.eq.s32.totalorder %s19, 0
      %p222 = por %p220, %p221
      %p223 = scmp.ne.s32.totalorder %s212, %s215
      %p224 = scmp.eq.s32.totalorder %s24, 1
      %p225 = por %p223, %p224
      %p226 = scmp.ne.s32.totalorder %s215, %s216
      %p227 = scmp.eq.s32.totalorder %s24, 0
      %p228 = por %p226, %p227
      %p229 = scmp.ne.s32.totalorder %s215, %s216
      %p230 = scmp.eq.s32.totalorder %s25, 1
      %p231 = por %p229, %p230
      %p233 = scmp.ne.s32.totalorder %s216, %s232
      %p234 = scmp.eq.s32.totalorder %s25, 0
      %p235 = por %p233, %p234
      %s236 = ssub.s32 %s19, %s26
      %p237 = scmp.eq.s32.totalorder %s236, 0
      %s239 = sadd.s32 %s238, 1
      %s240 = scalar_select %p237, %s238, %s239
      %p243 = pneg %p237
      %p244 = scmp.eq.s32.totalorder %s19, 1
      %p245 = por %p243, %p244
      %p246 = scmp.ne.s32.totalorder %s238, %s241
      %p247 = scmp.eq.s32.totalorder %s19, 0
      %p248 = por %p246, %p247
      %p249 = scmp.ne.s32.totalorder %s238, %s241
      %p250 = scmp.eq.s32.totalorder %s24, 1
      %p251 = por %p249, %p250
      %p252 = scmp.ne.s32.totalorder %s241, %s242
      %p253 = scmp.eq.s32.totalorder %s24, 0
      %p254 = por %p252, %p253
      %p255 = scmp.ne.s32.totalorder %s241, %s242
      %p256 = scmp.eq.s32.totalorder %s25, 1
      %p257 = por %p255, %p256
      %p259 = scmp.ne.s32.totalorder %s242, %s258
      %p260 = scmp.eq.s32.totalorder %s25, 0
      %p261 = por %p259, %p260
      %p262 = scmp.le.s32.totalorder 1, %s19
      %p263 = scmp.lt.s32.totalorder %s19, 3
      %p264 = pnand %p262, %p263
      %p265 = pneg %p264
      // Predicated region
      $region9: #{tpu_custom_call.1} parent=5 // pred_check
        _
      $region10: #{tpu_custom_call.1} parent=5 // pred_check_branch
        %267 = sbr.rel (%p264) target = $region12
      $region11: #{tpu_custom_call.1} parent=5 // pred_region
        %s268 = ssub.s32 %s19, 1
        // Predicated region
        $region13: #{tpu_custom_call.1} parent=11 // pred_check
          %p269 = pneg %p118
        $region14: #{tpu_custom_call.1} parent=11 // pred_check_branch
          %271 = sbr.rel (%p269) target = $region16
        $region15: #{tpu_custom_call.1} parent=11 // pred_region
          _
        $region16: #{tpu_custom_call.1} parent=11 // pred_fallthru
          _
        // Predicated region
        $region17: #{tpu_custom_call.1} parent=11 // pred_check
          %p272 = pneg %p139
        $region18: #{tpu_custom_call.1} parent=11 // pred_check_branch
          %274 = sbr.rel (%p272) target = $region20
        $region19: #{tpu_custom_call.1} parent=11 // pred_region
          _
        $region20: #{tpu_custom_call.1} parent=11 // pred_fallthru
          _
        // Predicated region
        $region21: #{tpu_custom_call.1} parent=11 // pred_check
          %p275 = pneg %p160
        $region22: #{tpu_custom_call.1} parent=11 // pred_check_branch
          %277 = sbr.rel (%p275) target = $region24
        $region23: #{tpu_custom_call.1} parent=11 // pred_region
          _
        $region24: #{tpu_custom_call.1} parent=11 // pred_fallthru
          _
        // Predicated region
        $region25: #{tpu_custom_call.1} parent=11 // pred_check
          %p278 = pneg %p181
        $region26: #{tpu_custom_call.1} parent=11 // pred_check_branch
          %280 = sbr.rel (%p278) target = $region28
        $region27: #{tpu_custom_call.1} parent=11 // pred_region
          _
        $region28: #{tpu_custom_call.1} parent=11 // pred_fallthru
          _
        // Predicated region
        $region29: #{tpu_custom_call.1} parent=11 // pred_check
          %p281 = pneg %p202
        $region30: #{tpu_custom_call.1} parent=11 // pred_check_branch
          %283 = sbr.rel (%p281) target = $region32
        $region31: #{tpu_custom_call.1} parent=11 // pred_region
          _
        $region32: #{tpu_custom_call.1} parent=11 // pred_fallthru
          _
      $region12: #{tpu_custom_call.1} parent=5 // pred_fallthru
        _
      %p284 = scmp.lt.s32.totalorder %s19, 2
      // Predicated region
      $region33: #{tpu_custom_call.1} parent=5 // pred_check
        %p285 = pneg %p284
      $region34: #{tpu_custom_call.1} parent=5 // pred_check_branch
        %287 = sbr.rel (%p285) target = $region36
      $region35: #{tpu_custom_call.1} parent=5 // pred_region
        // Predicated region
        $region37: #{tpu_custom_call.1} parent=35 // pred_check
          %p288 = pneg %p39
        $region38: #{tpu_custom_call.1} parent=35 // pred_check_branch
          %290 = sbr.rel (%p288) target = $region40
        $region39: #{tpu_custom_call.1} parent=35 // pred_region
          %p291 = scmp.lt.s32.totalorder %s19, 1
          %s292 = scalar_select %p291, %s19, 1
          %s293 = smul.addr %s292, 8
          %s294 = smul.addr %s293, 8
          %s295 = scalar_lea.vmem %s0, %s294
        $region40: #{tpu_custom_call.1} parent=35 // pred_fallthru
          _
        // Predicated region
        $region41: #{tpu_custom_call.1} parent=35 // pred_check
          %p296 = pneg %p65
        $region42: #{tpu_custom_call.1} parent=35 // pred_check_branch
          %298 = sbr.rel (%p296) target = $region44
        $region43: #{tpu_custom_call.1} parent=35 // pred_region
          %p299 = scmp.lt.s32.totalorder %s19, 1
          %s300 = scalar_select %p299, %s19, 1
          %s301 = smul.addr %s300, 16
          %s302 = smul.addr %s301, 8
          %s303 = scalar_lea.vmem %s1, %s302
        $region44: #{tpu_custom_call.1} parent=35 // pred_fallthru
          _
        // Predicated region
        $region45: #{tpu_custom_call.1} parent=35 // pred_check
          %p304 = pneg %p91
        $region46: #{tpu_custom_call.1} parent=35 // pred_check_branch
          %306 = sbr.rel (%p304) target = $region48
        $region47: #{tpu_custom_call.1} parent=35 // pred_region
          %p307 = scmp.lt.s32.totalorder %s19, 1
          %s308 = scalar_select %p307, %s19, 1
          %s309 = smul.addr %s308, 4
          %s310 = smul.addr %s309, 8
          %s311 = scalar_lea.vmem %s2, %s310
        $region48: #{tpu_custom_call.1} parent=35 // pred_fallthru
          _
      $region36: #{tpu_custom_call.1} parent=5 // pred_fallthru
        _
      %p312 = scmp.le.s32.totalorder 1, %s19
      %p313 = scmp.lt.s32.totalorder %s19, 3
      %p314 = pnand %p312, %p313
      %p315 = pneg %p314
      // Predicated region
      $region49: #{tpu_custom_call.1} parent=5 // pred_check
        _
      $region50: #{tpu_custom_call.1} parent=5 // pred_check_branch
        %317 = sbr.rel (%p314) target = $region52
      $region51: #{tpu_custom_call.1} parent=5 // pred_region
        %s318 = ssub.s32 %s19, 1
        %p319 = scmp.lt.s32.totalorder %s24, 1
        %s320 = scalar_select %p319, %s24, 1
        %s321 = smul.addr %s320, 8
        %s322 = smul.addr %s321, 8
        %s323 = scalar_lea.vmem %s0, %s322
        %p324 = pneg %p45
        %p325 = pneg %p42
        %p326 = scmp.lt.s32.totalorder %s24, 1
        %s327 = scalar_select %p326, %s24, 1
        %s328 = smul.addr %s327, 16
        %s329 = smul.addr %s328, 8
        %s330 = scalar_lea.vmem %s1, %s329
        %p331 = pneg %p71
        %p332 = pneg %p68
        %p333 = scmp.lt.s32.totalorder %s24, 1
        %s334 = scalar_select %p333, %s24, 1
        %s335 = smul.addr %s334, 4
        %s336 = smul.addr %s335, 8
        %s337 = scalar_lea.vmem %s2, %s336
        %p338 = pneg %p97
        %p339 = pneg %p94
        %p340 = pneg %p118
        %p341 = pneg %p115
        %p342 = pneg %p139
        %p343 = pneg %p136
        %p344 = pneg %p160
        %p345 = pneg %p157
        %p346 = pneg %p181
        %p347 = pneg %p178
        %p348 = pneg %p202
        %p349 = pneg %p199
        %p350 = pneg %p228
        %p351 = pneg %p225
        %s352 = sand.u32 %s215, 1
        %s353 = scalar_lea.sflag [#allocation3], %s352
        %s354 = sand.u32 %s215, 1
        %s355 = smul.addr %s354, 64
        %s356 = scalar_lea.vmem [#allocation2], %s355
        %p357 = pneg %p254
        %p358 = pneg %p251
        %p359 = scmp.lt.s32.totalorder %s24, 1
        %s360 = scalar_select %p359, %s24, 1
        %s361 = smul.addr %s360, 8
        %s362 = smul.addr %s361, 8
        %s363 = scalar_lea.vmem %s9, %s362
        %p364 = scmp.lt.s32.totalorder %s24, 1
        %s365 = scalar_select %p364, %s24, 1
        %s366 = smul.addr %s365, 8
        %s367 = smul.addr %s366, 8
        %s368 = scalar_lea.vmem %s0, %s367
        %p369 = scmp.lt.s32.totalorder %s24, 1
        %s370 = scalar_select %p369, %s24, 1
        %s371 = smul.addr %s370, 16
        %s372 = smul.addr %s371, 8
        %s373 = scalar_lea.vmem %s1, %s372
        %p374 = scmp.lt.s32.totalorder %s24, 1
        %s375 = scalar_select %p374, %s24, 1
        %s376 = smul.addr %s375, 4
        %s377 = smul.addr %s376, 8
        %s378 = scalar_lea.vmem %s2, %s377
        %p379 = scmp.lt.s32.totalorder %s24, 1
        %s380 = scalar_select %p379, %s24, 1
        %s381 = smul.addr %s380, 8
        %s382 = smul.addr %s381, 8
        %s383 = scalar_lea.vmem %s9, %s382
        %v384 = vld [vmem:[%s368] sm:$0xff]
        %v385 = vld [vmem:[%s368 + $0x8] sm:$0xff]
        %v386 = vld [vmem:[%s368 + $0x10] sm:$0xff]
        %v387 = vld [vmem:[%s368 + $0x18] sm:$0xff]
        %v388 = vld [vmem:[%s368 + $0x20] sm:$0xff]
        %v389 = vld [vmem:[%s368 + $0x28] sm:$0xff]
        %v390 = vld [vmem:[%s368 + $0x30] sm:$0xff]
        %v391 = vld [vmem:[%s368 + $0x38] sm:$0xff]
        %vm392 = vcmask 261120
        %v393 = vsel %vm392, %v384, 0.0
        %v394 = vsel %vm392, %v385, 0.0
        %v395 = vadd.f32 %v393, %v394
        %v396 = vsel %vm392, %v386, 0.0
        %v397 = vadd.f32 %v395, %v396
        %v398 = vsel %vm392, %v387, 0.0
        %v399 = vadd.f32 %v397, %v398
        %v400 = vsel %vm392, %v388, 0.0
        %v401 = vadd.f32 %v399, %v400
        %v402 = vsel %vm392, %v389, 0.0
        %v403 = vadd.f32 %v401, %v402
        %v404 = vsel %vm392, %v390, 0.0
        %v405 = vadd.f32 %v403, %v404
        %v406 = vsel %vm392, %v391, 0.0
        %v407 = vadd.f32 %v405, %v406
        %v408 = vrot.slane %v407, 4
        %v409 = vadd.f32 %v407, %v408
        %v410 = vrot.slane %v409, 2
        %v411 = vadd.f32 %v409, %v410
        %v412 = vrot.slane %v411, 1
        %v413 = vadd.f32 %v411, %v412
        %v414 = vrcp.pop 64.0
        %v415 = vmul.f32 %v413, %v414
        %v416 = vsub.f32 %v384, %v415
        %v417 = vsub.f32 %v385, %v415
        %v418 = vsub.f32 %v386, %v415
        %v419 = vsub.f32 %v387, %v415
        %v420 = vsub.f32 %v388, %v415
        %v421 = vsub.f32 %v389, %v415
        %v422 = vsub.f32 %v390, %v415
        %v423 = vsub.f32 %v391, %v415
        %v424 = vmul.f32 %v416, %v416
        %v425 = vmul.f32 %v417, %v417
        %v426 = vmul.f32 %v418, %v418
        %v427 = vmul.f32 %v419, %v419
        %v428 = vmul.f32 %v420, %v420
        %v429 = vmul.f32 %v421, %v421
        %v430 = vmul.f32 %v422, %v422
        %v431 = vmul.f32 %v423, %v423
        %v432 = vsel %vm392, %v424, 0.0
        %v433 = vsel %vm392, %v425, 0.0
        %v434 = vadd.f32 %v432, %v433
        %v435 = vsel %vm392, %v426, 0.0
        %v436 = vadd.f32 %v434, %v435
        %v437 = vsel %vm392, %v427, 0.0
        %v438 = vadd.f32 %v436, %v437
        %v439 = vsel %vm392, %v428, 0.0
        %v440 = vadd.f32 %v438, %v439
        %v441 = vsel %vm392, %v429, 0.0
        %v442 = vadd.f32 %v440, %v441
        %v443 = vsel %vm392, %v430, 0.0
        %v444 = vadd.f32 %v442, %v443
        %v445 = vsel %vm392, %v431, 0.0
        %v446 = vadd.f32 %v444, %v445
        %v447 = vrot.slane %v446, 4
        %v448 = vadd.f32 %v446, %v447
        %v449 = vrot.slane %v448, 2
        %v450 = vadd.f32 %v448, %v449
        %v451 = vrot.slane %v450, 1
        %v452 = vadd.f32 %v450, %v451
        %v453 = vmul.f32 %v452, %v414
        %v454 = vadd.f32 %v453, 1e-05
        %v455 = vrsqrt.pop %v454
        %v456 = vmul.f32 %v416, %v455
        %v457 = vmul.f32 %v417, %v455
        %v458 = vmul.f32 %v418, %v455
        %v459 = vmul.f32 %v419, %v455
        %v460 = vmul.f32 %v420, %v455
        %v461 = vmul.f32 %v421, %v455
        %v462 = vmul.f32 %v422, %v455
        %v463 = vmul.f32 %v423, %v455
        %v464 = vld [vmem:[%s3] sm:$0xff]
        %v465 = vld [vmem:[%s3 + $0x8] sm:$0xff]
        %v466 = vld [vmem:[%s3 + $0x10] sm:$0xff]
        %v467 = vld [vmem:[%s3 + $0x18] sm:$0xff]
        %v468 = vld [vmem:[%s4] sm:$0x1]
        %v470 = vlaneseq
        %v471 = vshrl.u32 %v470, 7
        %v472 = vsub.s32 0, %v471
        %v473 = vrot.slane %v468, %v472
        %v476 = vsel %vm392, %v456, 0
        %v479 = vsel %vm392, %v457, 0
        %v482 = vsel %vm392, %v458, 0
        %v485 = vsel %vm392, %v459, 0
        %v488 = vsel %vm392, %v460, 0
        %v491 = vsel %vm392, %v461, 0
        %v494 = vsel %vm392, %v462, 0
        %v497 = vsel %vm392, %v463, 0
        %499 = vmatprep.subr.mxu0 0.0
        %500 = vmatpush1.msra.mxu0 %v464
        %501 = vmatprep.subr.mxu0 0.0
        %502 = vmatpush1.msra.mxu0 %v465
        %503 = vmatprep.subr.mxu0 0.0
        %504 = vmatpush1.msra.mxu0 %v466
        %505 = vmatprep.subr.mxu0 0.0
        %506 = vmatpush1.msra.mxu0 %v467
        %507 = vmatprep.subr.mxu0 0.0
        %508 = vmatpush1.msra.mxu0 0.0
        %509 = vmatprep.subr.mxu0 0.0
        %510 = vmatpush1.msra.mxu0 0.0
        %511 = vmatprep.subr.mxu0 0.0
        %512 = vmatpush1.msra.mxu0 0.0
        %513 = vmatprep.subr.mxu0 0.0
        %514 = vmatpush1.msra.mxu0 0.0
        %515 = vmatprep.subr.mxu0 0.0
        %516 = vmatpush1.msra.mxu0 0.0
        %517 = vmatprep.subr.mxu0 0.0
        %518 = vmatpush1.msra.mxu0 0.0
        %519 = vmatprep.subr.mxu0 0.0
        %520 = vmatpush1.msra.mxu0 0.0
        %521 = vmatprep.subr.mxu0 0.0
        %522 = vmatpush1.msra.mxu0 0.0
        %523 = vmatprep.subr.mxu0 0.0
        %524 = vmatpush1.msra.mxu0 0.0
        %525 = vmatprep.subr.mxu0 0.0
        %526 = vmatpush1.msra.mxu0 0.0
        %527 = vmatprep.subr.mxu0 0.0
        %528 = vmatpush1.msra.mxu0 0.0
        %529 = vmatprep.subr.mxu0 0.0
        %530 = vmatpush1.msra.mxu0 0.0
        %531 = vmatprep.subr.mxu0 0.0
        %532 = vmatpush1.msra.mxu0 0.0
        %533 = vmatprep.subr.mxu0 0.0
        %534 = vmatpush1.msra.mxu0 0.0
        %535 = vmatprep.subr.mxu0 0.0
        %536 = vmatpush1.msra.mxu0 0.0
        %537 = vmatprep.subr.mxu0 0.0
        %538 = vmatpush1.msra.mxu0 0.0
        %539 = vmatprep.subr.mxu0 0.0
        %540 = vmatpush1.msra.mxu0 0.0
        %541 = vmatprep.subr.mxu0 0.0
        %542 = vmatpush1.msra.mxu0 0.0
        %543 = vmatprep.subr.mxu0 0.0
        %544 = vmatpush1.msra.mxu0 0.0
        %545 = vmatprep.subr.mxu0 0.0
        %546 = vmatpush1.msra.mxu0 0.0
        %547 = vmatprep.subr.mxu0 0.0
        %548 = vmatpush1.msra.mxu0 0.0
        %549 = vmatprep.subr.mxu0 0.0
        %550 = vmatpush1.msra.mxu0 0.0
        %551 = vmatprep.subr.mxu0 0.0
        %552 = vmatpush1.msra.mxu0 0.0
        %553 = vmatprep.subr.mxu0 0.0
        %554 = vmatpush1.msra.mxu0 0.0
        %555 = vmatprep.subr.mxu0 0.0
        %556 = vmatpush1.msra.mxu0 0.0
        %557 = vmatprep.subr.mxu0 0.0
        %558 = vmatpush1.msra.mxu0 0.0
        %559 = vmatprep.subr.mxu0 0.0
        %560 = vmatpush1.msra.mxu0 0.0
        %561 = vmatprep.subr.mxu0 0.0
        %562 = vmatpush1.msra.mxu0 0.0
        %563 = vmatprep.mubr.f32.mxu0 0.0
        %564 = vmatmul.mubr.f32.gmra.mrb[0].mxu0 %v476
        %v565 = vpop.f32.mrb[0].mxu0
        %v566 = vadd.f32 %v473, %v565
        %v567 = vpop.f32.mrb[0].mxu0
        %568 = vmatprep.mubr.f32.mxu0 0.0
        %569 = vmatmul.mubr.f32.gmra.mrb[0].mxu0 %v479
        %v570 = vpop.f32.mrb[0].mxu0
        %v571 = vadd.f32 %v473, %v570
        %v572 = vpop.f32.mrb[0].mxu0
        %573 = vmatprep.mubr.f32.mxu0 0.0
        %574 = vmatmul.mubr.f32.gmra.mrb[0].mxu0 %v482
        %v575 = vpop.f32.mrb[0].mxu0
        %v576 = vadd.f32 %v473, %v575
        %v577 = vpop.f32.mrb[0].mxu0
        %578 = vmatprep.mubr.f32.mxu0 0.0
        %579 = vmatmul.mubr.f32.gmra.mrb[0].mxu0 %v485
        %v580 = vpop.f32.mrb[0].mxu0
        %v581 = vadd.f32 %v473, %v580
        %v582 = vpop.f32.mrb[0].mxu0
        %583 = vmatprep.mubr.f32.mxu0 0.0
        %584 = vmatmul.mubr.f32.gmra.mrb[0].mxu0 %v488
        %v585 = vpop.f32.mrb[0].mxu0
        %v586 = vadd.f32 %v473, %v585
        %v587 = vpop.f32.mrb[0].mxu0
        %588 = vmatprep.mubr.f32.mxu0 0.0
        %589 = vmatmul.mubr.f32.gmra.mrb[0].mxu0 %v491
        %v590 = vpop.f32.mrb[0].mxu0
        %v591 = vadd.f32 %v473, %v590
        %v592 = vpop.f32.mrb[0].mxu0
        %593 = vmatprep.mubr.f32.mxu0 0.0
        %594 = vmatmul.mubr.f32.gmra.mrb[0].mxu0 %v494
        %v595 = vpop.f32.mrb[0].mxu0
        %v596 = vadd.f32 %v473, %v595
        %v597 = vpop.f32.mrb[0].mxu0
        %598 = vmatprep.mubr.f32.mxu0 0.0
        %599 = vmatmul.mubr.f32.gmra.mrb[0].mxu0 %v497
        %v600 = vpop.f32.mrb[0].mxu0
        %v601 = vadd.f32 %v473, %v600
        %v602 = vpop.f32.mrb[0].mxu0
        %603 = vdwg.mxu0
        %v604 = vld [vmem:[%s373] sm:$0xff]
        %v605 = vld [vmem:[%s373 + $0x8] sm:$0xff]
        %v606 = vld [vmem:[%s373 + $0x10] sm:$0xff]
        %v607 = vld [vmem:[%s373 + $0x18] sm:$0xff]
        %v608 = vld [vmem:[%s373 + $0x20] sm:$0xff]
        %v609 = vld [vmem:[%s373 + $0x28] sm:$0xff]
        %v610 = vld [vmem:[%s373 + $0x30] sm:$0xff]
        %v611 = vld [vmem:[%s373 + $0x38] sm:$0xff]
        %v612 = vld [vmem:[%s373 + $0x40] sm:$0xff]
        %v613 = vld [vmem:[%s373 + $0x48] sm:$0xff]
        %v614 = vld [vmem:[%s373 + $0x50] sm:$0xff]
        %v615 = vld [vmem:[%s373 + $0x58] sm:$0xff]
        %v616 = vld [vmem:[%s373 + $0x60] sm:$0xff]
        %v617 = vld [vmem:[%s373 + $0x68] sm:$0xff]
        %v618 = vld [vmem:[%s373 + $0x70] sm:$0xff]
        %v619 = vld [vmem:[%s373 + $0x78] sm:$0xff]
        %620 = vmatprep.subr.mxu0 0.0
        %621 = vmatpush1.msra.mxu0 %v604
        %622 = vmatprep.subr.mxu0 0.0
        %623 = vmatpush1.msra.mxu0 %v605
        %624 = vmatprep.subr.mxu0 0.0
        %625 = vmatpush1.msra.mxu0 %v606
        %626 = vmatprep.subr.mxu0 0.0
        %627 = vmatpush1.msra.mxu0 %v607
        %628 = vmatprep.subr.mxu0 0.0
        %629 = vmatpush1.msra.mxu0 %v608
        %630 = vmatprep.subr.mxu0 0.0
        %631 = vmatpush1.msra.mxu0 %v609
        %632 = vmatprep.subr.mxu0 0.0
        %633 = vmatpush1.msra.mxu0 %v610
        %634 = vmatprep.subr.mxu0 0.0
        %635 = vmatpush1.msra.mxu0 %v611
        %636 = vmatprep.subr.mxu0 0.0
        %637 = vmatpush1.msra.mxu0 %v612
        %638 = vmatprep.subr.mxu0 0.0
        %639 = vmatpush1.msra.mxu0 %v613
        %640 = vmatprep.subr.mxu0 0.0
        %641 = vmatpush1.msra.mxu0 %v614
        %642 = vmatprep.subr.mxu0 0.0
        %643 = vmatpush1.msra.mxu0 %v615
        %644 = vmatprep.subr.mxu0 0.0
        %645 = vmatpush1.msra.mxu0 %v616
        %646 = vmatprep.subr.mxu0 0.0
        %647 = vmatpush1.msra.mxu0 %v617
        %648 = vmatprep.subr.mxu0 0.0
        %649 = vmatpush1.msra.mxu0 %v618
        %650 = vmatprep.subr.mxu0 0.0
        %651 = vmatpush1.msra.mxu0 %v619
        %652 = vmatprep.subr.mxu0 0.0
        %653 = vmatpush1.msra.mxu0 0.0
        %654 = vmatprep.subr.mxu0 0.0
        %655 = vmatpush1.msra.mxu0 0.0
        %656 = vmatprep.subr.mxu0 0.0
        %657 = vmatpush1.msra.mxu0 0.0
        %658 = vmatprep.subr.mxu0 0.0
        %659 = vmatpush1.msra.mxu0 0.0
        %660 = vmatprep.subr.mxu0 0.0
        %661 = vmatpush1.msra.mxu0 0.0
        %662 = vmatprep.subr.mxu0 0.0
        %663 = vmatpush1.msra.mxu0 0.0
        %664 = vmatprep.subr.mxu0 0.0
        %665 = vmatpush1.msra.mxu0 0.0
        %666 = vmatprep.subr.mxu0 0.0
        %667 = vmatpush1.msra.mxu0 0.0
        %668 = vmatprep.subr.mxu0 0.0
        %669 = vmatpush1.msra.mxu0 0.0
        %670 = vmatprep.subr.mxu0 0.0
        %671 = vmatpush1.msra.mxu0 0.0
        %672 = vmatprep.subr.mxu0 0.0
        %673 = vmatpush1.msra.mxu0 0.0
        %674 = vmatprep.subr.mxu0 0.0
        %675 = vmatpush1.msra.mxu0 0.0
        %676 = vmatprep.subr.mxu0 0.0
        %677 = vmatpush1.msra.mxu0 0.0
        %678 = vmatprep.subr.mxu0 0.0
        %679 = vmatpush1.msra.mxu0 0.0
        %680 = vmatprep.subr.mxu0 0.0
        %681 = vmatpush1.msra.mxu0 0.0
        %682 = vmatprep.subr.mxu0 0.0
        %683 = vmatpush1.msra.mxu0 0.0
        %684 = vmatprep.mubr.f32.mxu0 0.0
        %685 = vmatmul.mubr.f32.gmra.mrb[0].mxu0 %v566
        %v686 = vpop.f32.mrb[0].mxu0
        %v687 = vadd.f32 0.0, %v686
        %v688 = vpop.f32.mrb[0].mxu0
        %689 = vmatprep.mubr.f32.mxu0 0.0
        %690 = vmatmul.mubr.f32.gmra.mrb[0].mxu0 %v571
        %v691 = vpop.f32.mrb[0].mxu0
        %v692 = vadd.f32 0.0, %v691
        %v693 = vpop.f32.mrb[0].mxu0
        %694 = vmatprep.mubr.f32.mxu0 0.0
        %695 = vmatmul.mubr.f32.gmra.mrb[0].mxu0 %v576
        %v696 = vpop.f32.mrb[0].mxu0
        %v697 = vadd.f32 0.0, %v696
        %v698 = vpop.f32.mrb[0].mxu0
        %699 = vmatprep.mubr.f32.mxu0 0.0
        %700 = vmatmul.mubr.f32.gmra.mrb[0].mxu0 %v581
        %v701 = vpop.f32.mrb[0].mxu0
        %v702 = vadd.f32 0.0, %v701
        %v703 = vpop.f32.mrb[0].mxu0
        %704 = vmatprep.mubr.f32.mxu0 0.0
        %705 = vmatmul.mubr.f32.gmra.mrb[0].mxu0 %v586
        %v706 = vpop.f32.mrb[0].mxu0
        %v707 = vadd.f32 0.0, %v706
        %v708 = vpop.f32.mrb[0].mxu0
        %709 = vmatprep.mubr.f32.mxu0 0.0
        %710 = vmatmul.mubr.f32.gmra.mrb[0].mxu0 %v591
        %v711 = vpop.f32.mrb[0].mxu0
        %v712 = vadd.f32 0.0, %v711
        %v713 = vpop.f32.mrb[0].mxu0
        %714 = vmatprep.mubr.f32.mxu0 0.0
        %715 = vmatmul.mubr.f32.gmra.mrb[0].mxu0 %v596
        %v716 = vpop.f32.mrb[0].mxu0
        %v717 = vadd.f32 0.0, %v716
        %v718 = vpop.f32.mrb[0].mxu0
        %719 = vmatprep.mubr.f32.mxu0 0.0
        %720 = vmatmul.mubr.f32.gmra.mrb[0].mxu0 %v601
        %v721 = vpop.f32.mrb[0].mxu0
        %v722 = vadd.f32 0.0, %v721
        %v723 = vpop.f32.mrb[0].mxu0
        %724 = vdwg.mxu0
        %v725 = vld [vmem:[%s6] sm:$0xf]
        %vm726 = vcmp.gt.f32.partialorder %v725, 0.0
        %v727 = vsel %vm726, 1, 0
        %v728 = vlaneseq
        %v729 = vshrl.u32 %v728, 7
        %v730 = vsub.s32 0, %v729
        %v731 = vrot.slane %v727, %v730
        %vm732 = vcmp.eq.s32.totalorder %v731, 1
        %v733 = vsel %vm732, %v687, -1e+30
        %v734 = vsel %vm732, %v692, -1e+30
        %v735 = vsel %vm732, %v697, -1e+30
        %v736 = vsel %vm732, %v702, -1e+30
        %v737 = vsel %vm732, %v707, -1e+30
        %v738 = vsel %vm732, %v712, -1e+30
        %v739 = vsel %vm732, %v717, -1e+30
        %v740 = vsel %vm732, %v722, -1e+30
        %v741 = vsel %vm392, %v733, -inf
        %742 = vmax.xlane.f32.xlu0 %v741
        %v743 = vpop.xlane.xlu0 %742
        %v744 = vsel %vm392, %v734, -inf
        %745 = vmax.xlane.f32.xlu0 %v744
        %v746 = vpop.xlane.xlu0 %745
        %v747 = vsel %vm392, %v735, -inf
        %748 = vmax.xlane.f32.xlu0 %v747
        %v749 = vpop.xlane.xlu0 %748
        %v750 = vsel %vm392, %v736, -inf
        %751 = vmax.xlane.f32.xlu0 %v750
        %v752 = vpop.xlane.xlu0 %751
        %v753 = vsel %vm392, %v737, -inf
        %754 = vmax.xlane.f32.xlu0 %v753
        %v755 = vpop.xlane.xlu0 %754
        %v756 = vsel %vm392, %v738, -inf
        %757 = vmax.xlane.f32.xlu0 %v756
        %v758 = vpop.xlane.xlu0 %757
        %v759 = vsel %vm392, %v739, -inf
        %760 = vmax.xlane.f32.xlu0 %v759
        %v761 = vpop.xlane.xlu0 %760
        %v762 = vsel %vm392, %v740, -inf
        %763 = vmax.xlane.f32.xlu0 %v762
        %v764 = vpop.xlane.xlu0 %763
        %v765 = vlaneseq
        %v766 = vshrl.u32 %v765, 7
        %v767 = vsub.s32 0, %v766
        %v768 = vrot.slane %v725, %v767
        %v769 = vmul.f32 %v743, %v768
        %v770 = vmul.f32 %v746, %v768
        %v771 = vmul.f32 %v749, %v768
        %v772 = vmul.f32 %v752, %v768
        %v773 = vmul.f32 %v755, %v768
        %v774 = vmul.f32 %v758, %v768
        %v775 = vmul.f32 %v761, %v768
        %v776 = vmul.f32 %v764, %v768
        %v777 = vadd.f32 %v769, 0.0
        %v778 = vadd.f32 %v770, 0.0
        %v779 = vadd.f32 %v771, 0.0
        %v780 = vadd.f32 %v772, 0.0
        %v781 = vadd.f32 %v773, 0.0
        %v782 = vadd.f32 %v774, 0.0
        %v783 = vadd.f32 %v775, 0.0
        %v784 = vadd.f32 %v776, 0.0
        %v785 = vlaneseq
        %v786 = vshrl.u32 %v785, 7
        %v787 = vsub.s32 1, %v786
        %v788 = vrot.slane %v727, %v787
        %vm789 = vcmp.eq.s32.totalorder %v788, 1
        %v790 = vsel %vm789, %v687, -1e+30
        %v791 = vsel %vm789, %v692, -1e+30
        %v792 = vsel %vm789, %v697, -1e+30
        %v793 = vsel %vm789, %v702, -1e+30
        %v794 = vsel %vm789, %v707, -1e+30
        %v795 = vsel %vm789, %v712, -1e+30
        %v796 = vsel %vm789, %v717, -1e+30
        %v797 = vsel %vm789, %v722, -1e+30
        %v798 = vsel %vm392, %v790, -inf
        %799 = vmax.xlane.f32.xlu0 %v798
        %v800 = vpop.xlane.xlu0 %799
        %v801 = vsel %vm392, %v791, -inf
        %802 = vmax.xlane.f32.xlu0 %v801
        %v803 = vpop.xlane.xlu0 %802
        %v804 = vsel %vm392, %v792, -inf
        %805 = vmax.xlane.f32.xlu0 %v804
        %v806 = vpop.xlane.xlu0 %805
        %v807 = vsel %vm392, %v793, -inf
        %808 = vmax.xlane.f32.xlu0 %v807
        %v809 = vpop.xlane.xlu0 %808
        %v810 = vsel %vm392, %v794, -inf
        %811 = vmax.xlane.f32.xlu0 %v810
        %v812 = vpop.xlane.xlu0 %811
        %v813 = vsel %vm392, %v795, -inf
        %814 = vmax.xlane.f32.xlu0 %v813
        %v815 = vpop.xlane.xlu0 %814
        %v816 = vsel %vm392, %v796, -inf
        %817 = vmax.xlane.f32.xlu0 %v816
        %v818 = vpop.xlane.xlu0 %817
        %v819 = vsel %vm392, %v797, -inf
        %820 = vmax.xlane.f32.xlu0 %v819
        %v821 = vpop.xlane.xlu0 %820
        %v822 = vlaneseq
        %v823 = vshrl.u32 %v822, 7
        %v824 = vsub.s32 1, %v823
        %v825 = vrot.slane %v725, %v824
        %v826 = vmul.f32 %v800, %v825
        %v827 = vmul.f32 %v803, %v825
        %v828 = vmul.f32 %v806, %v825
        %v829 = vmul.f32 %v809, %v825
        %v830 = vmul.f32 %v812, %v825
        %v831 = vmul.f32 %v815, %v825
        %v832 = vmul.f32 %v818, %v825
        %v833 = vmul.f32 %v821, %v825
        %v834 = vadd.f32 %v777, %v826
        %v835 = vadd.f32 %v778, %v827
        %v836 = vadd.f32 %v779, %v828
        %v837 = vadd.f32 %v780, %v829
        %v838 = vadd.f32 %v781, %v830
        %v839 = vadd.f32 %v782, %v831
        %v840 = vadd.f32 %v783, %v832
        %v841 = vadd.f32 %v784, %v833
        %v842 = vlaneseq
        %v843 = vshrl.u32 %v842, 7
        %v844 = vsub.s32 2, %v843
        %v845 = vrot.slane %v727, %v844
        %vm846 = vcmp.eq.s32.totalorder %v845, 1
        %v847 = vsel %vm846, %v687, -1e+30
        %v848 = vsel %vm846, %v692, -1e+30
        %v849 = vsel %vm846, %v697, -1e+30
        %v850 = vsel %vm846, %v702, -1e+30
        %v851 = vsel %vm846, %v707, -1e+30
        %v852 = vsel %vm846, %v712, -1e+30
        %v853 = vsel %vm846, %v717, -1e+30
        %v854 = vsel %vm846, %v722, -1e+30
        %v855 = vsel %vm392, %v847, -inf
        %856 = vmax.xlane.f32.xlu0 %v855
        %v857 = vpop.xlane.xlu0 %856
        %v858 = vsel %vm392, %v848, -inf
        %859 = vmax.xlane.f32.xlu0 %v858
        %v860 = vpop.xlane.xlu0 %859
        %v861 = vsel %vm392, %v849, -inf
        %862 = vmax.xlane.f32.xlu0 %v861
        %v863 = vpop.xlane.xlu0 %862
        %v864 = vsel %vm392, %v850, -inf
        %865 = vmax.xlane.f32.xlu0 %v864
        %v866 = vpop.xlane.xlu0 %865
        %v867 = vsel %vm392, %v851, -inf
        %868 = vmax.xlane.f32.xlu0 %v867
        %v869 = vpop.xlane.xlu0 %868
        %v870 = vsel %vm392, %v852, -inf
        %871 = vmax.xlane.f32.xlu0 %v870
        %v872 = vpop.xlane.xlu0 %871
        %v873 = vsel %vm392, %v853, -inf
        %874 = vmax.xlane.f32.xlu0 %v873
        %v875 = vpop.xlane.xlu0 %874
        %v876 = vsel %vm392, %v854, -inf
        %877 = vmax.xlane.f32.xlu0 %v876
        %v878 = vpop.xlane.xlu0 %877
        %v879 = vlaneseq
        %v880 = vshrl.u32 %v879, 7
        %v881 = vsub.s32 2, %v880
        %v882 = vrot.slane %v725, %v881
        %v883 = vmul.f32 %v857, %v882
        %v884 = vmul.f32 %v860, %v882
        %v885 = vmul.f32 %v863, %v882
        %v886 = vmul.f32 %v866, %v882
        %v887 = vmul.f32 %v869, %v882
        %v888 = vmul.f32 %v872, %v882
        %v889 = vmul.f32 %v875, %v882
        %v890 = vmul.f32 %v878, %v882
        %v891 = vadd.f32 %v834, %v883
        %v892 = vadd.f32 %v835, %v884
        %v893 = vadd.f32 %v836, %v885
        %v894 = vadd.f32 %v837, %v886
        %v895 = vadd.f32 %v838, %v887
        %v896 = vadd.f32 %v839, %v888
        %v897 = vadd.f32 %v840, %v889
        %v898 = vadd.f32 %v841, %v890
        %v899 = vlaneseq
        %v900 = vshrl.u32 %v899, 7
        %v901 = vsub.s32 3, %v900
        %v902 = vrot.slane %v727, %v901
        %vm903 = vcmp.eq.s32.totalorder %v902, 1
        %v904 = vsel %vm903, %v687, -1e+30
        %v905 = vsel %vm903, %v692, -1e+30
        %v906 = vsel %vm903, %v697, -1e+30
        %v907 = vsel %vm903, %v702, -1e+30
        %v908 = vsel %vm903, %v707, -1e+30
        %v909 = vsel %vm903, %v712, -1e+30
        %v910 = vsel %vm903, %v717, -1e+30
        %v911 = vsel %vm903, %v722, -1e+30
        %v912 = vsel %vm392, %v904, -inf
        %913 = vmax.xlane.f32.xlu0 %v912
        %v914 = vpop.xlane.xlu0 %913
        %v915 = vsel %vm392, %v905, -inf
        %916 = vmax.xlane.f32.xlu0 %v915
        %v917 = vpop.xlane.xlu0 %916
        %v918 = vsel %vm392, %v906, -inf
        %919 = vmax.xlane.f32.xlu0 %v918
        %v920 = vpop.xlane.xlu0 %919
        %v921 = vsel %vm392, %v907, -inf
        %922 = vmax.xlane.f32.xlu0 %v921
        %v923 = vpop.xlane.xlu0 %922
        %v924 = vsel %vm392, %v908, -inf
        %925 = vmax.xlane.f32.xlu0 %v924
        %v926 = vpop.xlane.xlu0 %925
        %v927 = vsel %vm392, %v909, -inf
        %928 = vmax.xlane.f32.xlu0 %v927
        %v929 = vpop.xlane.xlu0 %928
        %v930 = vsel %vm392, %v910, -inf
        %931 = vmax.xlane.f32.xlu0 %v930
        %v932 = vpop.xlane.xlu0 %931
        %v933 = vsel %vm392, %v911, -inf
        %934 = vmax.xlane.f32.xlu0 %v933
        %v935 = vpop.xlane.xlu0 %934
        %v936 = vlaneseq
        %v937 = vshrl.u32 %v936, 7
        %v938 = vsub.s32 3, %v937
        %v939 = vrot.slane %v725, %v938
        %v940 = vmul.f32 %v914, %v939
        %v941 = vmul.f32 %v917, %v939
        %v942 = vmul.f32 %v920, %v939
        %v943 = vmul.f32 %v923, %v939
        %v944 = vmul.f32 %v926, %v939
        %v945 = vmul.f32 %v929, %v939
        %v946 = vmul.f32 %v932, %v939
        %v947 = vmul.f32 %v935, %v939
        %v948 = vadd.f32 %v891, %v940
        %v949 = vadd.f32 %v892, %v941
        %v950 = vadd.f32 %v893, %v942
        %v951 = vadd.f32 %v894, %v943
        %v952 = vadd.f32 %v895, %v944
        %v953 = vadd.f32 %v896, %v945
        %v954 = vadd.f32 %v897, %v946
        %v955 = vadd.f32 %v898, %v947
        %v956 = vsub.f32 %v687, %v948
        %v957 = vsub.f32 %v692, %v949
        %v958 = vsub.f32 %v697, %v950
        %v959 = vsub.f32 %v702, %v951
        %v960 = vsub.f32 %v707, %v952
        %v961 = vsub.f32 %v712, %v953
        %v962 = vsub.f32 %v717, %v954
        %v963 = vsub.f32 %v722, %v955
        %v964 = vmul.f32 %v956, 1.442695
        %v965 = vpow.pop %v964
        %v966 = vmul.f32 %v957, 1.442695
        %v967 = vpow.pop %v966
        %v968 = vmul.f32 %v958, 1.442695
        %v969 = vpow.pop %v968
        %v970 = vmul.f32 %v959, 1.442695
        %v971 = vpow.pop %v970
        %v972 = vmul.f32 %v960, 1.442695
        %v973 = vpow.pop %v972
        %v974 = vmul.f32 %v961, 1.442695
        %v975 = vpow.pop %v974
        %v976 = vmul.f32 %v962, 1.442695
        %v977 = vpow.pop %v976
        %v978 = vmul.f32 %v963, 1.442695
        %v979 = vpow.pop %v978
        %v980 = vld [vmem:[%s7] sm:$0xff]
        %v981 = vld [vmem:[%s7 + $0x8] sm:$0xff]
        %v982 = vld [vmem:[%s7 + $0x10] sm:$0xff]
        %v983 = vld [vmem:[%s7 + $0x18] sm:$0xff]
        %v985 = vsel %vm392, %v965, 0
        %v988 = vsel %vm392, %v967, 0
        %v991 = vsel %vm392, %v969, 0
        %v994 = vsel %vm392, %v971, 0
        %v997 = vsel %vm392, %v973, 0
        %v1000 = vsel %vm392, %v975, 0
        %v1003 = vsel %vm392, %v977, 0
        %v1006 = vsel %vm392, %v979, 0
        %1008 = vmatprep.subr.mxu0 0.0
        %1009 = vmatpush1.msra.mxu0 %v980
        %1010 = vmatprep.subr.mxu0 0.0
        %1011 = vmatpush1.msra.mxu0 %v981
        %1012 = vmatprep.subr.mxu0 0.0
        %1013 = vmatpush1.msra.mxu0 %v982
        %1014 = vmatprep.subr.mxu0 0.0
        %1015 = vmatpush1.msra.mxu0 %v983
        %1016 = vmatprep.subr.mxu0 0.0
        %1017 = vmatpush1.msra.mxu0 0.0
        %1018 = vmatprep.subr.mxu0 0.0
        %1019 = vmatpush1.msra.mxu0 0.0
        %1020 = vmatprep.subr.mxu0 0.0
        %1021 = vmatpush1.msra.mxu0 0.0
        %1022 = vmatprep.subr.mxu0 0.0
        %1023 = vmatpush1.msra.mxu0 0.0
        %1024 = vmatprep.subr.mxu0 0.0
        %1025 = vmatpush1.msra.mxu0 0.0
        %1026 = vmatprep.subr.mxu0 0.0
        %1027 = vmatpush1.msra.mxu0 0.0
        %1028 = vmatprep.subr.mxu0 0.0
        %1029 = vmatpush1.msra.mxu0 0.0
        %1030 = vmatprep.subr.mxu0 0.0
        %1031 = vmatpush1.msra.mxu0 0.0
        %1032 = vmatprep.subr.mxu0 0.0
        %1033 = vmatpush1.msra.mxu0 0.0
        %1034 = vmatprep.subr.mxu0 0.0
        %1035 = vmatpush1.msra.mxu0 0.0
        %1036 = vmatprep.subr.mxu0 0.0
        %1037 = vmatpush1.msra.mxu0 0.0
        %1038 = vmatprep.subr.mxu0 0.0
        %1039 = vmatpush1.msra.mxu0 0.0
        %1040 = vmatprep.subr.mxu0 0.0
        %1041 = vmatpush1.msra.mxu0 0.0
        %1042 = vmatprep.subr.mxu0 0.0
        %1043 = vmatpush1.msra.mxu0 0.0
        %1044 = vmatprep.subr.mxu0 0.0
        %1045 = vmatpush1.msra.mxu0 0.0
        %1046 = vmatprep.subr.mxu0 0.0
        %1047 = vmatpush1.msra.mxu0 0.0
        %1048 = vmatprep.subr.mxu0 0.0
        %1049 = vmatpush1.msra.mxu0 0.0
        %1050 = vmatprep.subr.mxu0 0.0
        %1051 = vmatpush1.msra.mxu0 0.0
        %1052 = vmatprep.subr.mxu0 0.0
        %1053 = vmatpush1.msra.mxu0 0.0
        %1054 = vmatprep.subr.mxu0 0.0
        %1055 = vmatpush1.msra.mxu0 0.0
        %1056 = vmatprep.subr.mxu0 0.0
        %1057 = vmatpush1.msra.mxu0 0.0
        %1058 = vmatprep.subr.mxu0 0.0
        %1059 = vmatpush1.msra.mxu0 0.0
        %1060 = vmatprep.subr.mxu0 0.0
        %1061 = vmatpush1.msra.mxu0 0.0
        %1062 = vmatprep.subr.mxu0 0.0
        %1063 = vmatpush1.msra.mxu0 0.0
        %1064 = vmatprep.subr.mxu0 0.0
        %1065 = vmatpush1.msra.mxu0 0.0
        %1066 = vmatprep.subr.mxu0 0.0
        %1067 = vmatpush1.msra.mxu0 0.0
        %1068 = vmatprep.subr.mxu0 0.0
        %1069 = vmatpush1.msra.mxu0 0.0
        %1070 = vmatprep.subr.mxu0 0.0
        %1071 = vmatpush1.msra.mxu0 0.0
        %1072 = vmatprep.mubr.f32.mxu0 0.0
        %1073 = vmatmul.mubr.f32.gmra.mrb[0].mxu0 %v985
        %v1074 = vpop.f32.mrb[0].mxu0
        %v1075 = vadd.f32 0.0, %v1074
        %v1076 = vpop.f32.mrb[0].mxu0
        %1077 = vmatprep.mubr.f32.mxu0 0.0
        %1078 = vmatmul.mubr.f32.gmra.mrb[0].mxu0 %v988
        %v1079 = vpop.f32.mrb[0].mxu0
        %v1080 = vadd.f32 0.0, %v1079
        %v1081 = vpop.f32.mrb[0].mxu0
        %1082 = vmatprep.mubr.f32.mxu0 0.0
        %1083 = vmatmul.mubr.f32.gmra.mrb[0].mxu0 %v991
        %v1084 = vpop.f32.mrb[0].mxu0
        %v1085 = vadd.f32 0.0, %v1084
        %v1086 = vpop.f32.mrb[0].mxu0
        %1087 = vmatprep.mubr.f32.mxu0 0.0
        %1088 = vmatmul.mubr.f32.gmra.mrb[0].mxu0 %v994
        %v1089 = vpop.f32.mrb[0].mxu0
        %v1090 = vadd.f32 0.0, %v1089
        %v1091 = vpop.f32.mrb[0].mxu0
        %1092 = vmatprep.mubr.f32.mxu0 0.0
        %1093 = vmatmul.mubr.f32.gmra.mrb[0].mxu0 %v997
        %v1094 = vpop.f32.mrb[0].mxu0
        %v1095 = vadd.f32 0.0, %v1094
        %v1096 = vpop.f32.mrb[0].mxu0
        %1097 = vmatprep.mubr.f32.mxu0 0.0
        %1098 = vmatmul.mubr.f32.gmra.mrb[0].mxu0 %v1000
        %v1099 = vpop.f32.mrb[0].mxu0
        %v1100 = vadd.f32 0.0, %v1099
        %v1101 = vpop.f32.mrb[0].mxu0
        %1102 = vmatprep.mubr.f32.mxu0 0.0
        %1103 = vmatmul.mubr.f32.gmra.mrb[0].mxu0 %v1003
        %v1104 = vpop.f32.mrb[0].mxu0
        %v1105 = vadd.f32 0.0, %v1104
        %v1106 = vpop.f32.mrb[0].mxu0
        %1107 = vmatprep.mubr.f32.mxu0 0.0
        %1108 = vmatmul.mubr.f32.gmra.mrb[0].mxu0 %v1006
        %v1109 = vpop.f32.mrb[0].mxu0
        %v1110 = vadd.f32 0.0, %v1109
        %v1111 = vpop.f32.mrb[0].mxu0
        %1112 = vdwg.mxu0
        %v1113 = vrcp.pop %v1075
        %v1114 = vrcp.pop %v1080
        %v1115 = vrcp.pop %v1085
        %v1116 = vrcp.pop %v1090
        %v1117 = vrcp.pop %v1095
        %v1118 = vrcp.pop %v1100
        %v1119 = vrcp.pop %v1105
        %v1120 = vrcp.pop %v1110
        %v1121 = vmul.f32 %v1075, %v1113
        %v1122 = vmul.f32 %v1080, %v1114
        %v1123 = vmul.f32 %v1085, %v1115
        %v1124 = vmul.f32 %v1090, %v1116
        %v1125 = vmul.f32 %v1095, %v1117
        %v1126 = vmul.f32 %v1100, %v1118
        %v1127 = vmul.f32 %v1105, %v1119
        %v1128 = vmul.f32 %v1110, %v1120
        %v1129 = vsub.f32 2.0, %v1121
        %v1130 = vsub.f32 2.0, %v1122
        %v1131 = vsub.f32 2.0, %v1123
        %v1132 = vsub.f32 2.0, %v1124
        %v1133 = vsub.f32 2.0, %v1125
        %v1134 = vsub.f32 2.0, %v1126
        %v1135 = vsub.f32 2.0, %v1127
        %v1136 = vsub.f32 2.0, %v1128
        %v1137 = vmul.f32 %v1113, %v1129
        %v1138 = vmul.f32 %v1114, %v1130
        %v1139 = vmul.f32 %v1115, %v1131
        %v1140 = vmul.f32 %v1116, %v1132
        %v1141 = vmul.f32 %v1117, %v1133
        %v1142 = vmul.f32 %v1118, %v1134
        %v1143 = vmul.f32 %v1119, %v1135
        %v1144 = vmul.f32 %v1120, %v1136
        %v1145 = vmul.f32 %v965, %v1137
        %v1146 = vmul.f32 %v967, %v1138
        %v1147 = vmul.f32 %v969, %v1139
        %v1148 = vmul.f32 %v971, %v1140
        %v1149 = vmul.f32 %v973, %v1141
        %v1150 = vmul.f32 %v975, %v1142
        %v1151 = vmul.f32 %v977, %v1143
        %v1152 = vmul.f32 %v979, %v1144
        %1153 = vst.msk [vmem:[%s383] sm:$0xff] %vm392, %v1145
        %1154 = vst.msk [vmem:[%s383 + $0x8] sm:$0xff] %vm392, %v1146
        %1155 = vst.msk [vmem:[%s383 + $0x10] sm:$0xff] %vm392, %v1147
        %1156 = vst.msk [vmem:[%s383 + $0x18] sm:$0xff] %vm392, %v1148
        %1157 = vst.msk [vmem:[%s383 + $0x20] sm:$0xff] %vm392, %v1149
        %1158 = vst.msk [vmem:[%s383 + $0x28] sm:$0xff] %vm392, %v1150
        %1159 = vst.msk [vmem:[%s383 + $0x30] sm:$0xff] %vm392, %v1151
        %1160 = vst.msk [vmem:[%s383 + $0x38] sm:$0xff] %vm392, %v1152
        %v1161 = vld [vmem:[%s378] sm:$0xff]
        %v1162 = vld [vmem:[%s378 + $0x8] sm:$0xff]
        %v1163 = vld [vmem:[%s378 + $0x10] sm:$0xff]
        %v1164 = vld [vmem:[%s378 + $0x18] sm:$0xff]
        %v1166 = vsel %vm392, %v1145, 0
        %v1169 = vsel %vm392, %v1146, 0
        %v1172 = vsel %vm392, %v1147, 0
        %v1175 = vsel %vm392, %v1148, 0
        %v1178 = vsel %vm392, %v1149, 0
        %v1181 = vsel %vm392, %v1150, 0
        %v1184 = vsel %vm392, %v1151, 0
        %v1187 = vsel %vm392, %v1152, 0
        %1189 = vmatprep.subr.mxu0 0.0
        %1190 = vmatpush1.msra.mxu0 %v1161
        %1191 = vmatprep.subr.mxu0 0.0
        %1192 = vmatpush1.msra.mxu0 %v1162
        %1193 = vmatprep.subr.mxu0 0.0
        %1194 = vmatpush1.msra.mxu0 %v1163
        %1195 = vmatprep.subr.mxu0 0.0
        %1196 = vmatpush1.msra.mxu0 %v1164
        %1197 = vmatprep.subr.mxu0 0.0
        %1198 = vmatpush1.msra.mxu0 0.0
        %1199 = vmatprep.subr.mxu0 0.0
        %1200 = vmatpush1.msra.mxu0 0.0
        %1201 = vmatprep.subr.mxu0 0.0
        %1202 = vmatpush1.msra.mxu0 0.0
        %1203 = vmatprep.subr.mxu0 0.0
        %1204 = vmatpush1.msra.mxu0 0.0
        %1205 = vmatprep.subr.mxu0 0.0
        %1206 = vmatpush1.msra.mxu0 0.0
        %1207 = vmatprep.subr.mxu0 0.0
        %1208 = vmatpush1.msra.mxu0 0.0
        %1209 = vmatprep.subr.mxu0 0.0
        %1210 = vmatpush1.msra.mxu0 0.0
        %1211 = vmatprep.subr.mxu0 0.0
        %1212 = vmatpush1.msra.mxu0 0.0
        %1213 = vmatprep.subr.mxu0 0.0
        %1214 = vmatpush1.msra.mxu0 0.0
        %1215 = vmatprep.subr.mxu0 0.0
        %1216 = vmatpush1.msra.mxu0 0.0
        %1217 = vmatprep.subr.mxu0 0.0
        %1218 = vmatpush1.msra.mxu0 0.0
        %1219 = vmatprep.subr.mxu0 0.0
        %1220 = vmatpush1.msra.mxu0 0.0
        %1221 = vmatprep.subr.mxu0 0.0
        %1222 = vmatpush1.msra.mxu0 0.0
        %1223 = vmatprep.subr.mxu0 0.0
        %1224 = vmatpush1.msra.mxu0 0.0
        %1225 = vmatprep.subr.mxu0 0.0
        %1226 = vmatpush1.msra.mxu0 0.0
        %1227 = vmatprep.subr.mxu0 0.0
        %1228 = vmatpush1.msra.mxu0 0.0
        %1229 = vmatprep.subr.mxu0 0.0
        %1230 = vmatpush1.msra.mxu0 0.0
        %1231 = vmatprep.subr.mxu0 0.0
        %1232 = vmatpush1.msra.mxu0 0.0
        %1233 = vmatprep.subr.mxu0 0.0
        %1234 = vmatpush1.msra.mxu0 0.0
        %1235 = vmatprep.subr.mxu0 0.0
        %1236 = vmatpush1.msra.mxu0 0.0
        %1237 = vmatprep.subr.mxu0 0.0
        %1238 = vmatpush1.msra.mxu0 0.0
        %1239 = vmatprep.subr.mxu0 0.0
        %1240 = vmatpush1.msra.mxu0 0.0
        %1241 = vmatprep.subr.mxu0 0.0
        %1242 = vmatpush1.msra.mxu0 0.0
        %1243 = vmatprep.subr.mxu0 0.0
        %1244 = vmatpush1.msra.mxu0 0.0
        %1245 = vmatprep.subr.mxu0 0.0
        %1246 = vmatpush1.msra.mxu0 0.0
        %1247 = vmatprep.subr.mxu0 0.0
        %1248 = vmatpush1.msra.mxu0 0.0
        %1249 = vmatprep.subr.mxu0 0.0
        %1250 = vmatpush1.msra.mxu0 0.0
        %1251 = vmatprep.subr.mxu0 0.0
        %1252 = vmatpush1.msra.mxu0 0.0
        %1253 = vmatprep.mubr.f32.mxu0 0.0
        %1254 = vmatmul.mubr.f32.gmra.mrb[0].mxu0 %v1166
        %v1255 = vpop.f32.mrb[0].mxu0
        %v1256 = vadd.f32 0.0, %v1255
        %v1257 = vpop.f32.mrb[0].mxu0
        %1258 = vmatprep.mubr.f32.mxu0 0.0
        %1259 = vmatmul.mubr.f32.gmra.mrb[0].mxu0 %v1169
        %v1260 = vpop.f32.mrb[0].mxu0
        %v1261 = vadd.f32 0.0, %v1260
        %v1262 = vpop.f32.mrb[0].mxu0
        %1263 = vmatprep.mubr.f32.mxu0 0.0
        %1264 = vmatmul.mubr.f32.gmra.mrb[0].mxu0 %v1172
        %v1265 = vpop.f32.mrb[0].mxu0
        %v1266 = vadd.f32 0.0, %v1265
        %v1267 = vpop.f32.mrb[0].mxu0
        %1268 = vmatprep.mubr.f32.mxu0 0.0
        %1269 = vmatmul.mubr.f32.gmra.mrb[0].mxu0 %v1175
        %v1270 = vpop.f32.mrb[0].mxu0
        %v1271 = vadd.f32 0.0, %v1270
        %v1272 = vpop.f32.mrb[0].mxu0
        %1273 = vmatprep.mubr.f32.mxu0 0.0
        %1274 = vmatmul.mubr.f32.gmra.mrb[0].mxu0 %v1178
        %v1275 = vpop.f32.mrb[0].mxu0
        %v1276 = vadd.f32 0.0, %v1275
        %v1277 = vpop.f32.mrb[0].mxu0
        %1278 = vmatprep.mubr.f32.mxu0 0.0
        %1279 = vmatmul.mubr.f32.gmra.mrb[0].mxu0 %v1181
        %v1280 = vpop.f32.mrb[0].mxu0
        %v1281 = vadd.f32 0.0, %v1280
        %v1282 = vpop.f32.mrb[0].mxu0
        %1283 = vmatprep.mubr.f32.mxu0 0.0
        %1284 = vmatmul.mubr.f32.gmra.mrb[0].mxu0 %v1184
        %v1285 = vpop.f32.mrb[0].mxu0
        %v1286 = vadd.f32 0.0, %v1285
        %v1287 = vpop.f32.mrb[0].mxu0
        %1288 = vmatprep.mubr.f32.mxu0 0.0
        %1289 = vmatmul.mubr.f32.gmra.mrb[0].mxu0 %v1187
        %v1290 = vpop.f32.mrb[0].mxu0
        %v1291 = vadd.f32 0.0, %v1290
        %v1292 = vpop.f32.mrb[0].mxu0
        %1293 = vdwg.mxu0
        %v1294 = vld [vmem:[%s5] sm:$0xff]
        %v1295 = vld [vmem:[%s5 + $0x8] sm:$0xff]
        %v1296 = vld [vmem:[%s5 + $0x10] sm:$0xff]
        %v1297 = vld [vmem:[%s5 + $0x18] sm:$0xff]
        %v1298 = vld [vmem:[%s5 + $0x20] sm:$0xff]
        %v1299 = vld [vmem:[%s5 + $0x28] sm:$0xff]
        %v1300 = vld [vmem:[%s5 + $0x30] sm:$0xff]
        %v1301 = vld [vmem:[%s5 + $0x38] sm:$0xff]
        %v1302 = vld [vmem:[%s5 + $0x40] sm:$0xff]
        %v1303 = vld [vmem:[%s5 + $0x48] sm:$0xff]
        %v1304 = vld [vmem:[%s5 + $0x50] sm:$0xff]
        %v1305 = vld [vmem:[%s5 + $0x58] sm:$0xff]
        %v1306 = vld [vmem:[%s5 + $0x60] sm:$0xff]
        %v1307 = vld [vmem:[%s5 + $0x68] sm:$0xff]
        %v1308 = vld [vmem:[%s5 + $0x70] sm:$0xff]
        %v1309 = vld [vmem:[%s5 + $0x78] sm:$0xff]
        %1310 = vmatprep.subr.mxu0 0.0
        %1311 = vmatpush1.msra.mxu0 %v1294
        %1312 = vmatprep.subr.mxu0 0.0
        %1313 = vmatpush1.msra.mxu0 %v1295
        %1314 = vmatprep.subr.mxu0 0.0
        %1315 = vmatpush1.msra.mxu0 %v1296
        %1316 = vmatprep.subr.mxu0 0.0
        %1317 = vmatpush1.msra.mxu0 %v1297
        %1318 = vmatprep.subr.mxu0 0.0
        %1319 = vmatpush1.msra.mxu0 %v1298
        %1320 = vmatprep.subr.mxu0 0.0
        %1321 = vmatpush1.msra.mxu0 %v1299
        %1322 = vmatprep.subr.mxu0 0.0
        %1323 = vmatpush1.msra.mxu0 %v1300
        %1324 = vmatprep.subr.mxu0 0.0
        %1325 = vmatpush1.msra.mxu0 %v1301
        %1326 = vmatprep.subr.mxu0 0.0
        %1327 = vmatpush1.msra.mxu0 %v1302
        %1328 = vmatprep.subr.mxu0 0.0
        %1329 = vmatpush1.msra.mxu0 %v1303
        %1330 = vmatprep.subr.mxu0 0.0
        %1331 = vmatpush1.msra.mxu0 %v1304
        %1332 = vmatprep.subr.mxu0 0.0
        %1333 = vmatpush1.msra.mxu0 %v1305
        %1334 = vmatprep.subr.mxu0 0.0
        %1335 = vmatpush1.msra.mxu0 %v1306
        %1336 = vmatprep.subr.mxu0 0.0
        %1337 = vmatpush1.msra.mxu0 %v1307
        %1338 = vmatprep.subr.mxu0 0.0
        %1339 = vmatpush1.msra.mxu0 %v1308
        %1340 = vmatprep.subr.mxu0 0.0
        %1341 = vmatpush1.msra.mxu0 %v1309
        %1342 = vmatprep.subr.mxu0 0.0
        %1343 = vmatpush1.msra.mxu0 0.0
        %1344 = vmatprep.subr.mxu0 0.0
        %1345 = vmatpush1.msra.mxu0 0.0
        %1346 = vmatprep.subr.mxu0 0.0
        %1347 = vmatpush1.msra.mxu0 0.0
        %1348 = vmatprep.subr.mxu0 0.0
        %1349 = vmatpush1.msra.mxu0 0.0
        %1350 = vmatprep.subr.mxu0 0.0
        %1351 = vmatpush1.msra.mxu0 0.0
        %1352 = vmatprep.subr.mxu0 0.0
        %1353 = vmatpush1.msra.mxu0 0.0
        %1354 = vmatprep.subr.mxu0 0.0
        %1355 = vmatpush1.msra.mxu0 0.0
        %1356 = vmatprep.subr.mxu0 0.0
        %1357 = vmatpush1.msra.mxu0 0.0
        %1358 = vmatprep.subr.mxu0 0.0
        %1359 = vmatpush1.msra.mxu0 0.0
        %1360 = vmatprep.subr.mxu0 0.0
        %1361 = vmatpush1.msra.mxu0 0.0
        %1362 = vmatprep.subr.mxu0 0.0
        %1363 = vmatpush1.msra.mxu0 0.0
        %1364 = vmatprep.subr.mxu0 0.0
        %1365 = vmatpush1.msra.mxu0 0.0
        %1366 = vmatprep.subr.mxu0 0.0
        %1367 = vmatpush1.msra.mxu0 0.0
        %1368 = vmatprep.subr.mxu0 0.0
        %1369 = vmatpush1.msra.mxu0 0.0
        %1370 = vmatprep.subr.mxu0 0.0
        %1371 = vmatpush1.msra.mxu0 0.0
        %1372 = vmatprep.subr.mxu0 0.0
        %1373 = vmatpush1.msra.mxu0 0.0
        %1374 = vmatprep.mubr.f32.mxu0 0.0
        %1375 = vmatmul.mubr.f32.gmra.mrb[0].mxu0 %v1256
        %v1376 = vpop.f32.mrb[0].mxu0
        %v1377 = vadd.f32 0.0, %v1376
        %v1378 = vpop.f32.mrb[0].mxu0
        %1379 = vmatprep.mubr.f32.mxu0 0.0
        %1380 = vmatmul.mubr.f32.gmra.mrb[0].mxu0 %v1261
        %v1381 = vpop.f32.mrb[0].mxu0
        %v1382 = vadd.f32 0.0, %v1381
        %v1383 = vpop.f32.mrb[0].mxu0
        %1384 = vmatprep.mubr.f32.mxu0 0.0
        %1385 = vmatmul.mubr.f32.gmra.mrb[0].mxu0 %v1266
        %v1386 = vpop.f32.mrb[0].mxu0
        %v1387 = vadd.f32 0.0, %v1386
        %v1388 = vpop.f32.mrb[0].mxu0
        %1389 = vmatprep.mubr.f32.mxu0 0.0
        %1390 = vmatmul.mubr.f32.gmra.mrb[0].mxu0 %v1271
        %v1391 = vpop.f32.mrb[0].mxu0
        %v1392 = vadd.f32 0.0, %v1391
        %v1393 = vpop.f32.mrb[0].mxu0
        %1394 = vmatprep.mubr.f32.mxu0 0.0
        %1395 = vmatmul.mubr.f32.gmra.mrb[0].mxu0 %v1276
        %v1396 = vpop.f32.mrb[0].mxu0
        %v1397 = vadd.f32 0.0, %v1396
        %v1398 = vpop.f32.mrb[0].mxu0
        %1399 = vmatprep.mubr.f32.mxu0 0.0
        %1400 = vmatmul.mubr.f32.gmra.mrb[0].mxu0 %v1281
        %v1401 = vpop.f32.mrb[0].mxu0
        %v1402 = vadd.f32 0.0, %v1401
        %v1403 = vpop.f32.mrb[0].mxu0
        %1404 = vmatprep.mubr.f32.mxu0 0.0
        %1405 = vmatmul.mubr.f32.gmra.mrb[0].mxu0 %v1286
        %v1406 = vpop.f32.mrb[0].mxu0
        %v1407 = vadd.f32 0.0, %v1406
        %v1408 = vpop.f32.mrb[0].mxu0
        %1409 = vmatprep.mubr.f32.mxu0 0.0
        %1410 = vmatmul.mubr.f32.gmra.mrb[0].mxu0 %v1291
        %v1411 = vpop.f32.mrb[0].mxu0
        %v1412 = vadd.f32 0.0, %v1411
        %v1413 = vpop.f32.mrb[0].mxu0
        %1414 = vdwg.mxu0
        %1415 = vst [vmem:[%s356] sm:$0xff] %v1377
        %1416 = vst [vmem:[%s356 + $0x8] sm:$0xff] %v1382
        %1417 = vst [vmem:[%s356 + $0x10] sm:$0xff] %v1387
        %1418 = vst [vmem:[%s356 + $0x18] sm:$0xff] %v1392
        %1419 = vst [vmem:[%s356 + $0x20] sm:$0xff] %v1397
        %1420 = vst [vmem:[%s356 + $0x28] sm:$0xff] %v1402
        %1421 = vst [vmem:[%s356 + $0x30] sm:$0xff] %v1407
        %1422 = vst [vmem:[%s356 + $0x38] sm:$0xff] %v1412
        %s1423 = sand.u32 %s215, 1
        %s1424 = scalar_lea.sflag [#allocation3], %s1423
        %s1425 = sand.u32 %s215, 1
        %s1426 = smul.addr %s1425, 64
        %s1427 = scalar_lea.vmem [#allocation2], %s1426
        %p1428 = scmp.lt.s32.totalorder %s24, 1
        %s1429 = scalar_select %p1428, %s24, 1
        %s1430 = smul.addr %s1429, 8
        %s1431 = smul.addr %s1430, 8
        %s1432 = scalar_lea.vmem %s9, %s1431
        // Predicated region
        $region53: #{tpu_custom_call.1} parent=51 // pred_check
          %p1433 = pneg %p225
        $region54: #{tpu_custom_call.1} parent=51 // pred_check_branch
          %1435 = sbr.rel (%p1433) target = $region56
        $region55: #{tpu_custom_call.1} parent=51 // pred_region
          %s1437 = ssub.s32 1024, 1024
          %1438 = vsyncadd %s1424, %s1437
          %s1439 = smul.addr %s24, 8
          %s1440 = smul.addr %s1439, 128
          %s1441 = scalar_lea.hbm %s8, %s1440
          %s1442 = sshll.u32 %s1427, 4
          %s1443 = int_to_ptr.vmem [resolvable:$true] %s1442
          %1448 = dma.vmem_to_hbm [thread:$0]  %s1443, 1024, %s1441, %s1424, 128, 128, 8
        $region56: #{tpu_custom_call.1} parent=51 // pred_fallthru
          _
        // Predicated region
        $region57: #{tpu_custom_call.1} parent=51 // pred_check
          %p1449 = pneg %p251
        $region58: #{tpu_custom_call.1} parent=51 // pred_check_branch
          %1451 = sbr.rel (%p1449) target = $region60
        $region59: #{tpu_custom_call.1} parent=51 // pred_region
          _
        $region60: #{tpu_custom_call.1} parent=51 // pred_fallthru
          _
      $region52: #{tpu_custom_call.1} parent=5 // pred_fallthru
        _
      %p1452 = scmp.le.s32.totalorder 2, %s19
      // Predicated region
      $region61: #{tpu_custom_call.1} parent=5 // pred_check
        %p1453 = pneg %p1452
      $region62: #{tpu_custom_call.1} parent=5 // pred_check_branch
        %1455 = sbr.rel (%p1453) target = $region64
      $region63: #{tpu_custom_call.1} parent=5 // pred_region
        %s1456 = ssub.s32 %s19, 2
        // Predicated region
        $region65: #{tpu_custom_call.1} parent=63 // pred_check
          %p1457 = pneg %p231
        $region66: #{tpu_custom_call.1} parent=63 // pred_check_branch
          %1459 = sbr.rel (%p1457) target = $region68
        $region67: #{tpu_custom_call.1} parent=63 // pred_region
          %s1460 = sand.u32 %s216, 1
          %s1461 = scalar_lea.sflag [#allocation3], %s1460
          %s1462 = sand.u32 %s216, 1
          %s1463 = smul.addr %s1462, 64
          %s1464 = scalar_lea.vmem [#allocation2], %s1463
          %1465 = dma.done %s1461, 1024
        $region68: #{tpu_custom_call.1} parent=63 // pred_fallthru
          _
        // Predicated region
        $region69: #{tpu_custom_call.1} parent=63 // pred_check
          %p1466 = pneg %p257
        $region70: #{tpu_custom_call.1} parent=63 // pred_check_branch
          %1468 = sbr.rel (%p1466) target = $region72
        $region71: #{tpu_custom_call.1} parent=63 // pred_region
          %p1469 = scmp.lt.s32.totalorder %s25, 1
          %s1470 = scalar_select %p1469, %s25, 1
          %s1471 = smul.addr %s1470, 8
          %s1472 = smul.addr %s1471, 8
          %s1473 = scalar_lea.vmem %s9, %s1472
        $region72: #{tpu_custom_call.1} parent=63 // pred_fallthru
          _
      $region64: #{tpu_custom_call.1} parent=5 // pred_fallthru
        _
    $region6: #{tpu_custom_call.1} parent=1 // loop_footer
      %s23 = sadd.s32 1, %s19
    $region7: #{tpu_custom_call.1} parent=1 // loop_footer_branch
      %18 = sbr.rel target = $region3
    $region8: #{tpu_custom_call.1} parent=1 // loop_exit
      _
    %1474 = vsyncpa [#allocation3], 1
    %s1475 = scalar_lea.sflag [#allocation3], 1
    %1476 = vsyncpa %s1475, 1

</llo_original>
